<compile_context>
chip_gen: v5e
topology: v5e:2x2
jax: 0.10.0
libtpu: 0.0.40
codegen_flags: <defaults>
</compile_context>

<pallas_src>
import jax
import jax.numpy as jnp
from jax.experimental import pallas as pl
from jax.experimental.pallas import tpu as pltpu


def _round_up(a, m):
    return ((a + m - 1) // m) * m


# ----------------------------------------------------------------------------
# Kernel
# ----------------------------------------------------------------------------
def _make_kernel(dim_act, dim_act_p, packed):
    half = dim_act_p // 2

    def kernel(x_ref, wcat_ref, b1_ref, w2_ref, b2_ref, wout_ref,
               maxact_ref, out_ref):
        # One fused MXU pass over x with [W_lin_p | W1]; f32 accumulation.
        x = x_ref[...].astype(wcat_ref.dtype)
        xc = jnp.dot(x, wcat_ref[...], preferred_element_type=jnp.float32)

        feat_lin = xc[:, :dim_act_p]                      # lanes [0:dim_act] useful
        h = jnp.maximum(xc[:, dim_act_p:] + b1_ref[...], 0.0)
        h = jnp.dot(h.astype(w2_ref.dtype), w2_ref[...],
                    preferred_element_type=jnp.float32) + b2_ref[...]
        h = jnp.maximum(h, 0.0)
        feat_nlc = jnp.dot(h.astype(wout_ref.dtype), wout_ref[...],
                           preferred_element_type=jnp.float32)

        if packed:
            # W_out columns were placed at lane offset `half` wrapper-side, so
            # feat_lin and feat_nlc occupy disjoint lanes of one tile -> a
            # single tanh pass covers both branches.
            t = jnp.tanh(feat_lin + feat_nlc)
            # Half-width lane rotation is self-inverse => direction-independent;
            # it brings tanh(feat_nlc) down to lanes [0:dim_act].  XLU slot, so
            # it hides under the remaining EUP work.
            t_sw = pltpu.roll(t, shift=half, axis=1)
            feat = t[:, :dim_act] + 0.1 * t_sw[:, :dim_act]
        else:
            # Fallback (2*dim_act > padded lane width): separate tanh passes.
            feat = (jnp.tanh(feat_lin[:, :dim_act])
                    + 0.1 * jnp.tanh(feat_nlc[:, :dim_act]))

        out_ref[...] = (jnp.tanh(feat) * maxact_ref[...]).astype(out_ref.dtype)

    return kernel


# ----------------------------------------------------------------------------
# One-time parameter preparation (hoisted out of the hot forward path)
# ----------------------------------------------------------------------------
def prepare_nlcfel_params(w_lin, w1, b1, w2, b2, w_out, max_act, *,
                          use_bf16=True, bf16_hidden=True):
    """Pad / fuse / cast the NLCFEL weights once.  Weights are (in, out)."""
    f32 = jnp.float32
    dim_ref, dim_act = w_lin.shape
    u0 = w1.shape[1]
    u1 = w2.shape[1]

    dim_act_p = _round_up(max(dim_act, 1), 128)           # lane-dense intermediates
    packed = (2 * dim_act) <= dim_act_p
    nlc_off = dim_act_p // 2 if packed else 0

    # Linear branch padded to the lane tile; nonlinear branch's output columns
    # placed at lane offset nlc_off (see kernel tanh packing).
    w_lin_p = jnp.pad(w_lin.astype(f32), ((0, 0), (0, dim_act_p - dim_act)))
    w_out_p = jnp.pad(w_out.astype(f32),
                      ((0, 0), (nlc_off, dim_act_p - dim_act - nlc_off)))
    w_cat = jnp.concatenate([w_lin_p, w1.astype(f32)], axis=1)   # [W_lin_p | W1]

    mm = jnp.bfloat16 if use_bf16 else f32
    # On v5e (no bf16 VPU/EUP) set bf16_hidden=False: keeps W2/W_out (and hence
    # the f32->bf16 packs of h) out of the kernel with no MXU downside at K=32.
    mm_h = jnp.bfloat16 if (use_bf16 and bf16_hidden) else f32

    ma = jnp.asarray(max_act, dtype=f32).reshape(-1)
    if ma.shape[0] == 1:
        ma = jnp.broadcast_to(ma, (dim_act,))

    return dict(
        w_cat=w_cat.astype(mm),
        b1=jnp.asarray(b1, f32).reshape(1, u0),
        w2=jnp.asarray(w2, f32).astype(mm_h),
        b2=jnp.asarray(b2, f32).reshape(1, u1),
        w_out=w_out_p.astype(mm_h),
        max_act=ma.reshape(1, dim_act),
        dim_ref=dim_ref, dim_act=dim_act, dim_act_p=dim_act_p,
        u0=u0, u1=u1, packed=packed,
    )


# ----------------------------------------------------------------------------
# Tiling / VMEM heuristics
# ----------------------------------------------------------------------------
def _choose_tb(B, tb_max):
    """Batch tile: big (amortize ~0.35us/step grid overhead), multiple of 8,
    and for modest batches split in two so v7x's two TensorCores both work."""
    tb_max = max(8, _round_up(int(tb_max), 8))
    if B > tb_max:
        return tb_max                                   # grid length >= 2 automatically
    if B >= 512:
        return _round_up(pl.cdiv(B, 2), 8)              # two roughly equal tiles
    return B                                            # tiny batch: one full-dim tile


def _vmem_limit_bytes(tb, dim_ref, u0, u1, dim_act_p, x_bytes, w_bytes):
    """Tile-math VMEM budget (generous ~2x working set), clamped to 32 MiB so
    it stays inside v7x's scoped VMEM while allowing large batch tiles."""
    lane = lambda n: _round_up(max(int(n), 1), 128)
    sub = lambda n: _round_up(max(int(n), 1), 8)
    buf = lambda r, c, b: sub(r) * lane(c) * b
    tiles = 2 * (buf(tb, dim_ref, x_bytes) + buf(tb, dim_act_p, 4))   # dbl-buffered x / out
    weights = 2 * (buf(dim_ref, dim_act_p + u0, w_bytes)
                   + buf(u0, u1, w_bytes) + buf(u1, dim_act_p, w_bytes)
                   + 3 * buf(1, max(u0, u1, dim_act_p), 4))
    interm = 4 * buf(tb, dim_act_p + u0, 4)                            # xc / h / t / feat
    total = tiles + weights + interm
    return int(min(max(2 * total, 8 << 20), 32 << 20))


# ----------------------------------------------------------------------------
# Forward
# ----------------------------------------------------------------------------
def nlcfel_forward(x, params, *, tb_max=2048):
    """NLCFEL forward.  `params` comes from prepare_nlcfel_params (called once)."""
    B, dim_ref = x.shape
    assert dim_ref == params["dim_ref"]
    dim_act, dim_act_p = params["dim_act"], params["dim_act_p"]
    u0, u1 = params["u0"], params["u1"]

    tb = _choose_tb(B, tb_max)
    grid = (pl.cdiv(B, tb),)    # ragged last tile OK: rows are independent, OOB writes masked

    kernel = _make_kernel(dim_act, dim_act_p, params["packed"])
    vmem = _vmem_limit_bytes(tb, dim_ref, u0, u1, dim_act_p,
                             jnp.dtype(x.dtype).itemsize,
                             jnp.dtype(params["w_cat"].dtype).itemsize)

    full = lambda shape: pl.BlockSpec(shape, lambda i, _s=shape: tuple(0 for _ in _s))

    return pl.pallas_call(
        kernel,
        out_shape=jax.ShapeDtypeStruct((B, dim_act), jnp.float32),
        grid_spec=pltpu.PrefetchScalarGridSpec(
            num_scalar_prefetch=0,
            grid=grid,
            in_specs=[
                pl.BlockSpec((tb, dim_ref), lambda i: (i, 0)),   # x tile (pipelined)
                full((dim_ref, dim_act_p + u0)),                 # [W_lin_p | W1] (resident)
                full((1, u0)),                                   # b1
                full((u0, u1)),                                  # W2
                full((1, u1)),                                   # b2
                full((u1, dim_act_p)),                           # W_out (lane-shifted)
                full((1, dim_act)),                              # max_act
            ],
            out_specs=pl.BlockSpec((tb, dim_act), lambda i: (i, 0)),   # narrow output store
        ),
        compiler_params=pltpu.CompilerParams(
            dimension_semantics=("parallel",),
            vmem_limit_bytes=vmem,
        ),
    )(x, params["w_cat"], params["b1"], params["w2"], params["b2"],
      params["w_out"], params["max_act"])


# ----------------------------------------------------------------------------
# Pure-JAX reference (mirrors NLCFEL.forward)
# ----------------------------------------------------------------------------
def reference_forward(x, w_lin, w1, b1, w2, b2, w_out, max_act):
    feat_lin = x @ w_lin
    h = jnp.maximum(x @ w1 + b1, 0.0)
    h = jnp.maximum(h @ w2 + b2, 0.0)
    feat_nlc = h @ w_out
    feat = jnp.tanh(feat_lin) + jnp.tanh(feat_nlc) * 0.1
    return jnp.tanh(feat) * max_act


if __name__ == "__main__":
    # Controller-sized problem: small feature dims, batch of reference vectors.
    B = 1000            # -> two batch tiles (504 + ragged 496): exercises pipelining + masking
    dim_ref = 16
    units = (32, 32)
    dim_act = 4

    key = jax.random.PRNGKey(0)
    kx, klin, k1, kb1, k2, kb2, kout, kmax = jax.random.split(key, 8)

    x = jax.random.normal(kx, (B, dim_ref), dtype=jnp.float32)
    # Deterministic synthetic parameters (stored as (in, out) for x @ W); the
    # nonlinear branch is scaled so its contribution is clearly visible.
    w_lin = jax.random.normal(klin, (dim_ref, dim_act), dtype=jnp.float32) * 0.1
    w1 = jax.random.normal(k1, (dim_ref, units[0]), dtype=jnp.float32) * 0.3
    b1 = jax.random.normal(kb1, (units[0],), dtype=jnp.float32) * 0.2
    w2 = jax.random.normal(k2, (units[0], units[1]), dtype=jnp.float32) * 0.3
    b2 = jax.random.normal(kb2, (units[1],), dtype=jnp.float32) * 0.2
    w_out = jax.random.normal(kout, (units[1], dim_act), dtype=jnp.float32) * 0.3
    max_act = jnp.abs(jax.random.normal(kmax, (1, dim_act), dtype=jnp.float32)) + 1.0

    ref = reference_forward(x, w_lin, w1, b1.reshape(1, -1), w2, b2.reshape(1, -1),
                            w_out, max_act)

    # ---- f32 path (tight check); weight prep hoisted out of the forward call ----
    params32 = prepare_nlcfel_params(w_lin, w1, b1, w2, b2, w_out, max_act,
                                     use_bf16=False)
    out = jax.block_until_ready(nlcfel_forward(x, params32))
    assert out.shape == (B, dim_act)
    assert jnp.allclose(out, ref, atol=2e-5, rtol=2e-5), "f32 mismatch vs reference"

    # ---- tiny batch / single ragged tile path ----
    out_small = jax.block_until_ready(nlcfel_forward(x[:3], params32))
    assert out_small.shape == (3, dim_act)
    assert jnp.allclose(out_small, ref[:3], atol=2e-5, rtol=2e-5), "small-batch mismatch"

    # ---- bf16 matmul path (caller provides bf16 activations); looser tolerance ----
    params_bf16 = prepare_nlcfel_params(w_lin, w1, b1, w2, b2, w_out, max_act,
                                        use_bf16=True)
    out_bf16 = jax.block_until_ready(nlcfel_forward(x.astype(jnp.bfloat16), params_bf16))
    assert out_bf16.shape == (B, dim_act)
    assert jnp.allclose(out_bf16, ref, atol=5e-2, rtol=5e-2), "bf16 mismatch vs reference"

    print("KERNEL_OK")
</pallas_src>

<mosaic_0001>
module attributes {stable_mosaic.version = 11 : i64} {
  func.func @kernel(%arg0: i32, %arg1: memref<504x16xf32, #tpu.memory_space<vmem>>, %arg2: memref<16x160xf32, #tpu.memory_space<vmem>>, %arg3: memref<1x32xf32, #tpu.memory_space<vmem>>, %arg4: memref<32x32xf32, #tpu.memory_space<vmem>>, %arg5: memref<1x32xf32, #tpu.memory_space<vmem>>, %arg6: memref<32x128xf32, #tpu.memory_space<vmem>>, %arg7: memref<1x4xf32, #tpu.memory_space<vmem>>, %arg8: memref<504x4xf32, #tpu.memory_space<vmem>>) attributes {dimension_semantics = [#tpu.dimension_semantics<parallel>], iteration_bounds = array<i64: 2>, scalar_prefetch = 0 : i64, scratch_operands = 0 : i64, tpu.core_type = #tpu.core_type<tc>, window_params = [{transform_indices = @transform_0, window_bounds = array<i64: 504, 16>}, {pipeline_mode = #tpu.pipeline_mode<synchronous>, transform_indices = @transform_1, window_bounds = array<i64: 16, 160>}, {pipeline_mode = #tpu.pipeline_mode<synchronous>, transform_indices = @transform_2, window_bounds = array<i64: 1, 32>}, {pipeline_mode = #tpu.pipeline_mode<synchronous>, transform_indices = @transform_3, window_bounds = array<i64: 32, 32>}, {pipeline_mode = #tpu.pipeline_mode<synchronous>, transform_indices = @transform_4, window_bounds = array<i64: 1, 32>}, {pipeline_mode = #tpu.pipeline_mode<synchronous>, transform_indices = @transform_5, window_bounds = array<i64: 32, 128>}, {pipeline_mode = #tpu.pipeline_mode<synchronous>, transform_indices = @transform_6, window_bounds = array<i64: 1, 4>}, {transform_indices = @transform_7, window_bounds = array<i64: 504, 4>}]} {
    %c0 = arith.constant 0 : index
    %c0_0 = arith.constant 0 : index
    %0 = vector.load %arg1[%c0, %c0_0] : memref<504x16xf32, #tpu.memory_space<vmem>>, vector<504x16xf32>
    %c0_1 = arith.constant 0 : index
    %c0_2 = arith.constant 0 : index
    %1 = vector.load %arg2[%c0_1, %c0_2] : memref<16x160xf32, #tpu.memory_space<vmem>>, vector<16x160xf32>
    %cst = arith.constant dense<0.000000e+00> : vector<504x160xf32>
    %2 = tpu.matmul %0, %1, %cst {dimension_numbers = #tpu.dot_dimension_numbers<[1], [0], [0], [1], [0, 0, 1, 1], [], []>} : vector<504x16xf32>, vector<16x160xf32>, vector<504x160xf32> -> vector<504x160xf32>
    %3 = vector.extract_strided_slice %2 {offsets = [0, 0], sizes = [504, 128], strides = [1, 1]} : vector<504x160xf32> to vector<504x128xf32>
    %4 = vector.extract_strided_slice %2 {offsets = [0, 128], sizes = [504, 32], strides = [1, 1]} : vector<504x160xf32> to vector<504x32xf32>
    %c0_3 = arith.constant 0 : index
    %c0_4 = arith.constant 0 : index
    %5 = vector.load %arg3[%c0_3, %c0_4] : memref<1x32xf32, #tpu.memory_space<vmem>>, vector<1x32xf32>
    %6 = vector.broadcast %5 : vector<1x32xf32> to vector<504x32xf32>
    %7 = arith.addf %4, %6 : vector<504x32xf32>
    %cst_5 = arith.constant 0.000000e+00 : f32
    %8 = vector.broadcast %cst_5 : f32 to vector<504x32xf32>
    %9 = arith.maximumf %7, %8 : vector<504x32xf32>
    %c0_6 = arith.constant 0 : index
    %c0_7 = arith.constant 0 : index
    %10 = vector.load %arg4[%c0_6, %c0_7] : memref<32x32xf32, #tpu.memory_space<vmem>>, vector<32x32xf32>
    %cst_8 = arith.constant dense<0.000000e+00> : vector<504x32xf32>
    %11 = tpu.matmul %9, %10, %cst_8 {dimension_numbers = #tpu.dot_dimension_numbers<[1], [0], [0], [1], [0, 0, 1, 1], [], []>} : vector<504x32xf32>, vector<32x32xf32>, vector<504x32xf32> -> vector<504x32xf32>
    %c0_9 = arith.constant 0 : index
    %c0_10 = arith.constant 0 : index
    %12 = vector.load %arg5[%c0_9, %c0_10] : memref<1x32xf32, #tpu.memory_space<vmem>>, vector<1x32xf32>
    %13 = vector.broadcast %12 : vector<1x32xf32> to vector<504x32xf32>
    %14 = arith.addf %11, %13 : vector<504x32xf32>
    %cst_11 = arith.constant 0.000000e+00 : f32
    %15 = vector.broadcast %cst_11 : f32 to vector<504x32xf32>
    %16 = arith.maximumf %14, %15 : vector<504x32xf32>
    %c0_12 = arith.constant 0 : index
    %c0_13 = arith.constant 0 : index
    %17 = vector.load %arg6[%c0_12, %c0_13] : memref<32x128xf32, #tpu.memory_space<vmem>>, vector<32x128xf32>
    %cst_14 = arith.constant dense<0.000000e+00> : vector<504x128xf32>
    %18 = tpu.matmul %16, %17, %cst_14 {dimension_numbers = #tpu.dot_dimension_numbers<[1], [0], [0], [1], [0, 0, 1, 1], [], []>} : vector<504x32xf32>, vector<32x128xf32>, vector<504x128xf32> -> vector<504x128xf32>
    %19 = arith.addf %3, %18 : vector<504x128xf32>
    %20 = math.tanh %19 : vector<504x128xf32>
    %c64_i32 = arith.constant 64 : i32
    %21 = tpu.dynamic_rotate %20 by %c64_i32 dim 1 : vector<504x128xf32>, i32 -> vector<504x128xf32>
    %22 = vector.extract_strided_slice %20 {offsets = [0, 0], sizes = [504, 4], strides = [1, 1]} : vector<504x128xf32> to vector<504x4xf32>
    %23 = vector.extract_strided_slice %21 {offsets = [0, 0], sizes = [504, 4], strides = [1, 1]} : vector<504x128xf32> to vector<504x4xf32>
    %cst_15 = arith.constant 1.000000e-01 : f32
    %24 = vector.broadcast %cst_15 : f32 to vector<504x4xf32>
    %25 = arith.mulf %24, %23 : vector<504x4xf32>
    %26 = arith.addf %22, %25 : vector<504x4xf32>
    %27 = math.tanh %26 : vector<504x4xf32>
    %c0_16 = arith.constant 0 : index
    %c0_17 = arith.constant 0 : index
    %28 = vector.load %arg7[%c0_16, %c0_17] : memref<1x4xf32, #tpu.memory_space<vmem>>, vector<1x4xf32>
    %29 = vector.broadcast %28 : vector<1x4xf32> to vector<504x4xf32>
    %30 = arith.mulf %27, %29 : vector<504x4xf32>
    %c0_18 = arith.constant 0 : index
    %c0_19 = arith.constant 0 : index
    %31 = vector.load %arg8[%c0_18, %c0_19] : memref<504x4xf32, #tpu.memory_space<vmem>>, vector<504x4xf32>
    tpu.vector_store %arg8[%c0_18, %c0_19], %30 {strides = array<i32>} : memref<504x4xf32, #tpu.memory_space<vmem>>, vector<504x4xf32>,
    return
  }
  func.func @transform_0(%arg0: i32) -> (i32, i32) {
    %c0_i32 = arith.constant 0 : i32
    %c0_i32_0 = arith.constant 0 : i32
    return %arg0, %c0_i32 : i32, i32
  }
  func.func @transform_1(%arg0: i32) -> (i32, i32) {
    %c0_i32 = arith.constant 0 : i32
    %c0_i32_0 = arith.constant 0 : i32
    %c0_i32_1 = arith.constant 0 : i32
    return %c0_i32, %c0_i32_0 : i32, i32
  }
  func.func @transform_2(%arg0: i32) -> (i32, i32) {
    %c0_i32 = arith.constant 0 : i32
    %c0_i32_0 = arith.constant 0 : i32
    %c0_i32_1 = arith.constant 0 : i32
    return %c0_i32, %c0_i32_0 : i32, i32
  }
  func.func @transform_3(%arg0: i32) -> (i32, i32) {
    %c0_i32 = arith.constant 0 : i32
    %c0_i32_0 = arith.constant 0 : i32
    %c0_i32_1 = arith.constant 0 : i32
    return %c0_i32, %c0_i32_0 : i32, i32
  }
  func.func @transform_4(%arg0: i32) -> (i32, i32) {
    %c0_i32 = arith.constant 0 : i32
    %c0_i32_0 = arith.constant 0 : i32
    %c0_i32_1 = arith.constant 0 : i32
    return %c0_i32, %c0_i32_0 : i32, i32
  }
  func.func @transform_5(%arg0: i32) -> (i32, i32) {
    %c0_i32 = arith.constant 0 : i32
    %c0_i32_0 = arith.constant 0 : i32
    %c0_i32_1 = arith.constant 0 : i32
    return %c0_i32, %c0_i32_0 : i32, i32
  }
  func.func @transform_6(%arg0: i32) -> (i32, i32) {
    %c0_i32 = arith.constant 0 : i32
    %c0_i32_0 = arith.constant 0 : i32
    %c0_i32_1 = arith.constant 0 : i32
    return %c0_i32, %c0_i32_0 : i32, i32
  }
  func.func @transform_7(%arg0: i32) -> (i32, i32) {
    %c0_i32 = arith.constant 0 : i32
    %c0_i32_0 = arith.constant 0 : i32
    return %arg0, %c0_i32 : i32, i32
  }
}

</mosaic_0001>

<llo_original>
// kernel: tpu_custom_call.1
$region0: #{tpu_custom_call.1}
  #allocation0 [shape = 'u32[]', space=smem, size = 0x4, offset = 0x4, fixed_abs, tag = 'smem constant byte address 0x4 - core index']
  #allocation1 [shape = 'u32[72,128]{1,0:T(1,128)}', space=vmem, size = 0x9000, scoped, tag = 'internal scratch']
  %s0 = inlined_call_operand.vmem [shape: f32[1000,16], index: 0, kind: input, shape index: {}]
  %s1 = inlined_call_operand.vmem [shape: f32[16,160], index: 1, kind: input, shape index: {}]
  %s2 = inlined_call_operand.vmem [shape: f32[1,32], index: 2, kind: input, shape index: {}]
  %s3 = inlined_call_operand.vmem [shape: f32[32,32], index: 3, kind: input, shape index: {}]
  %s4 = inlined_call_operand.vmem [shape: f32[1,32], index: 4, kind: input, shape index: {}]
  %s5 = inlined_call_operand.vmem [shape: f32[32,128], index: 5, kind: input, shape index: {}]
  %s6 = inlined_call_operand.vmem [shape: f32[1,4], index: 6, kind: input, shape index: {}]
  %s7 = inlined_call_operand.vmem [shape: f32[1000,4], index: 7, kind: output, shape index: {}]
  %s8 = sld [smem:[#allocation0]]
  $region109: #{tpu_custom_call.1} parent=0
    _
  %s10 = ssub.s32 1, %s8
  %s11 = scalar_select 0, %s10, %s8
  $region1: #{tpu_custom_call.1} parent=0
    #allocation2 [shape = 'u8[516096]{0}', space=vmem, size = 0x7e000, scoped, tag = 'output window, operand 0']
    loop: start=0, step=1, limit=4
    $region2: #{tpu_custom_call.1} parent=1 // loop_pre_header
      _
    $region3: #{tpu_custom_call.1} parent=1 // loop_header
      %s13 = sphi 0, %s17
      %p14 = scmp.ge.s32.totalorder %s13, 4
      %s23 = sphi 0, %s25
      %s26 = sphi 0, %s23
      %s27 = sphi 0, %s26
      %s43 = sphi 0, %s27
      %s47 = sphi 0, %s47
      %s49 = sphi 0, %s47
      %s50 = sphi 0, %s49
      %s64 = sphi 0, %s50
      %s68 = sphi 0, %s68
      %s70 = sphi 0, %s68
      %s71 = sphi 0, %s70
      %s85 = sphi 0, %s71
      %s89 = sphi 0, %s89
      %s91 = sphi 0, %s89
      %s92 = sphi 0, %s91
      %s106 = sphi 0, %s92
      %s110 = sphi 0, %s110
      %s112 = sphi 0, %s110
      %s113 = sphi 0, %s112
      %s127 = sphi 0, %s113
      %s131 = sphi 0, %s131
      %s133 = sphi 0, %s131
      %s134 = sphi 0, %s133
      %s148 = sphi 0, %s134
      %s152 = sphi 0, %s152
      %s154 = sphi 0, %s152
      %s155 = sphi 0, %s154
      %s169 = sphi 0, %s155
      %s175 = sphi 0, %s177
      %s178 = sphi 0, %s175
      %s179 = sphi 0, %s178
      %s195 = sphi 0, %s179
    $region4: #{tpu_custom_call.1} parent=1 // loop_header_branch
      %16 = sbr.rel (%p14) target = $region8
    $region5: #{tpu_custom_call.1} parent=1 // loop_body
      %s18 = ssub.s32 %s13, 1
      %s19 = ssub.s32 %s13, 2
      %s20 = sadd.s32 %s13, 1
      %s21 = ssub.s32 %s13, %s20
      %p22 = scmp.eq.s32.totalorder %s21, 0
      %s24 = sadd.s32 %s23, 1
      %s25 = scalar_select %p22, %s23, %s24
      %p28 = pneg %p22
      %p29 = scmp.eq.s32.totalorder %s13, 1
      %p30 = por %p28, %p29
      %p31 = scmp.ne.s32.totalorder %s23, %s26
      %p32 = scmp.eq.s32.totalorder %s13, 0
      %p33 = por %p31, %p32
      %p34 = scmp.ne.s32.totalorder %s23, %s26
      %p35 = scmp.eq.s32.totalorder %s18, 1
      %p36 = por %p34, %p35
      %p37 = scmp.ne.s32.totalorder %s26, %s27
      %p38 = scmp.eq.s32.totalorder %s18, 0
      %p39 = por %p37, %p38
      %p40 = scmp.ne.s32.totalorder %s26, %s27
      %p41 = scmp.eq.s32.totalorder %s19, 1
      %p42 = por %p40, %p41
      %p44 = scmp.ne.s32.totalorder %s27, %s43
      %p45 = scmp.eq.s32.totalorder %s19, 0
      %p46 = por %p44, %p45
      %s48 = sadd.s32 %s47, 1
      %p51 = scmp.eq.s32.totalorder %s13, 1
      %p52 = scmp.ne.s32.totalorder %s47, %s49
      %p53 = scmp.eq.s32.totalorder %s13, 0
      %p54 = por %p52, %p53
      %p55 = scmp.ne.s32.totalorder %s47, %s49
      %p56 = scmp.eq.s32.totalorder %s18, 1
      %p57 = por %p55, %p56
      %p58 = scmp.ne.s32.totalorder %s49, %s50
      %p59 = scmp.eq.s32.totalorder %s18, 0
      %p60 = por %p58, %p59
      %p61 = scmp.ne.s32.totalorder %s49, %s50
      %p62 = scmp.eq.s32.totalorder %s19, 1
      %p63 = por %p61, %p62
      %p65 = scmp.ne.s32.totalorder %s50, %s64
      %p66 = scmp.eq.s32.totalorder %s19, 0
      %p67 = por %p65, %p66
      %s69 = sadd.s32 %s68, 1
      %p72 = scmp.eq.s32.totalorder %s13, 1
      %p73 = scmp.ne.s32.totalorder %s68, %s70
      %p74 = scmp.eq.s32.totalorder %s13, 0
      %p75 = por %p73, %p74
      %p76 = scmp.ne.s32.totalorder %s68, %s70
      %p77 = scmp.eq.s32.totalorder %s18, 1
      %p78 = por %p76, %p77
      %p79 = scmp.ne.s32.totalorder %s70, %s71
      %p80 = scmp.eq.s32.totalorder %s18, 0
      %p81 = por %p79, %p80
      %p82 = scmp.ne.s32.totalorder %s70, %s71
      %p83 = scmp.eq.s32.totalorder %s19, 1
      %p84 = por %p82, %p83
      %p86 = scmp.ne.s32.totalorder %s71, %s85
      %p87 = scmp.eq.s32.totalorder %s19, 0
      %p88 = por %p86, %p87
      %s90 = sadd.s32 %s89, 1
      %p93 = scmp.eq.s32.totalorder %s13, 1
      %p94 = scmp.ne.s32.totalorder %s89, %s91
      %p95 = scmp.eq.s32.totalorder %s13, 0
      %p96 = por %p94, %p95
      %p97 = scmp.ne.s32.totalorder %s89, %s91
      %p98 = scmp.eq.s32.totalorder %s18, 1
      %p99 = por %p97, %p98
      %p100 = scmp.ne.s32.totalorder %s91, %s92
      %p101 = scmp.eq.s32.totalorder %s18, 0
      %p102 = por %p100, %p101
      %p103 = scmp.ne.s32.totalorder %s91, %s92
      %p104 = scmp.eq.s32.totalorder %s19, 1
      %p105 = por %p103, %p104
      %p107 = scmp.ne.s32.totalorder %s92, %s106
      %p108 = scmp.eq.s32.totalorder %s19, 0
      %p109 = por %p107, %p108
      %s111 = sadd.s32 %s110, 1
      %p114 = scmp.eq.s32.totalorder %s13, 1
      %p115 = scmp.ne.s32.totalorder %s110, %s112
      %p116 = scmp.eq.s32.totalorder %s13, 0
      %p117 = por %p115, %p116
      %p118 = scmp.ne.s32.totalorder %s110, %s112
      %p119 = scmp.eq.s32.totalorder %s18, 1
      %p120 = por %p118, %p119
      %p121 = scmp.ne.s32.totalorder %s112, %s113
      %p122 = scmp.eq.s32.totalorder %s18, 0
      %p123 = por %p121, %p122
      %p124 = scmp.ne.s32.totalorder %s112, %s113
      %p125 = scmp.eq.s32.totalorder %s19, 1
      %p126 = por %p124, %p125
      %p128 = scmp.ne.s32.totalorder %s113, %s127
      %p129 = scmp.eq.s32.totalorder %s19, 0
      %p130 = por %p128, %p129
      %s132 = sadd.s32 %s131, 1
      %p135 = scmp.eq.s32.totalorder %s13, 1
      %p136 = scmp.ne.s32.totalorder %s131, %s133
      %p137 = scmp.eq.s32.totalorder %s13, 0
      %p138 = por %p136, %p137
      %p139 = scmp.ne.s32.totalorder %s131, %s133
      %p140 = scmp.eq.s32.totalorder %s18, 1
      %p141 = por %p139, %p140
      %p142 = scmp.ne.s32.totalorder %s133, %s134
      %p143 = scmp.eq.s32.totalorder %s18, 0
      %p144 = por %p142, %p143
      %p145 = scmp.ne.s32.totalorder %s133, %s134
      %p146 = scmp.eq.s32.totalorder %s19, 1
      %p147 = por %p145, %p146
      %p149 = scmp.ne.s32.totalorder %s134, %s148
      %p150 = scmp.eq.s32.totalorder %s19, 0
      %p151 = por %p149, %p150
      %s153 = sadd.s32 %s152, 1
      %p156 = scmp.eq.s32.totalorder %s13, 1
      %p157 = scmp.ne.s32.totalorder %s152, %s154
      %p158 = scmp.eq.s32.totalorder %s13, 0
      %p159 = por %p157, %p158
      %p160 = scmp.ne.s32.totalorder %s152, %s154
      %p161 = scmp.eq.s32.totalorder %s18, 1
      %p162 = por %p160, %p161
      %p163 = scmp.ne.s32.totalorder %s154, %s155
      %p164 = scmp.eq.s32.totalorder %s18, 0
      %p165 = por %p163, %p164
      %p166 = scmp.ne.s32.totalorder %s154, %s155
      %p167 = scmp.eq.s32.totalorder %s19, 1
      %p168 = por %p166, %p167
      %p170 = scmp.ne.s32.totalorder %s155, %s169
      %p171 = scmp.eq.s32.totalorder %s19, 0
      %p172 = por %p170, %p171
      %s173 = ssub.s32 %s13, %s20
      %p174 = scmp.eq.s32.totalorder %s173, 0
      %s176 = sadd.s32 %s175, 1
      %s177 = scalar_select %p174, %s175, %s176
      %p180 = pneg %p174
      %p181 = scmp.eq.s32.totalorder %s13, 1
      %p182 = por %p180, %p181
      %p183 = scmp.ne.s32.totalorder %s175, %s178
      %p184 = scmp.eq.s32.totalorder %s13, 0
      %p185 = por %p183, %p184
      %p186 = scmp.ne.s32.totalorder %s175, %s178
      %p187 = scmp.eq.s32.totalorder %s18, 1
      %p188 = por %p186, %p187
      %p189 = scmp.ne.s32.totalorder %s178, %s179
      %p190 = scmp.eq.s32.totalorder %s18, 0
      %p191 = por %p189, %p190
      %p192 = scmp.ne.s32.totalorder %s178, %s179
      %p193 = scmp.eq.s32.totalorder %s19, 1
      %p194 = por %p192, %p193
      %p196 = scmp.ne.s32.totalorder %s179, %s195
      %p197 = scmp.eq.s32.totalorder %s19, 0
      %p198 = por %p196, %p197
      %p199 = scmp.le.s32.totalorder 1, %s13
      %p200 = scmp.lt.s32.totalorder %s13, 3
      %p201 = pnand %p199, %p200
      %p202 = pneg %p201
      // Predicated region
      $region9: #{tpu_custom_call.1} parent=5 // pred_check
        _
      $region10: #{tpu_custom_call.1} parent=5 // pred_check_branch
        %204 = sbr.rel (%p201) target = $region12
      $region11: #{tpu_custom_call.1} parent=5 // pred_region
        %s205 = ssub.s32 %s13, 1
        // Predicated region
        $region13: #{tpu_custom_call.1} parent=11 // pred_check
          %p206 = pneg %p60
        $region14: #{tpu_custom_call.1} parent=11 // pred_check_branch
          %208 = sbr.rel (%p206) target = $region16
        $region15: #{tpu_custom_call.1} parent=11 // pred_region
          _
        $region16: #{tpu_custom_call.1} parent=11 // pred_fallthru
          _
        // Predicated region
        $region17: #{tpu_custom_call.1} parent=11 // pred_check
          %p209 = pneg %p81
        $region18: #{tpu_custom_call.1} parent=11 // pred_check_branch
          %211 = sbr.rel (%p209) target = $region20
        $region19: #{tpu_custom_call.1} parent=11 // pred_region
          _
        $region20: #{tpu_custom_call.1} parent=11 // pred_fallthru
          _
        // Predicated region
        $region21: #{tpu_custom_call.1} parent=11 // pred_check
          %p212 = pneg %p102
        $region22: #{tpu_custom_call.1} parent=11 // pred_check_branch
          %214 = sbr.rel (%p212) target = $region24
        $region23: #{tpu_custom_call.1} parent=11 // pred_region
          _
        $region24: #{tpu_custom_call.1} parent=11 // pred_fallthru
          _
        // Predicated region
        $region25: #{tpu_custom_call.1} parent=11 // pred_check
          %p215 = pneg %p123
        $region26: #{tpu_custom_call.1} parent=11 // pred_check_branch
          %217 = sbr.rel (%p215) target = $region28
        $region27: #{tpu_custom_call.1} parent=11 // pred_region
          _
        $region28: #{tpu_custom_call.1} parent=11 // pred_fallthru
          _
        // Predicated region
        $region29: #{tpu_custom_call.1} parent=11 // pred_check
          %p218 = pneg %p144
        $region30: #{tpu_custom_call.1} parent=11 // pred_check_branch
          %220 = sbr.rel (%p218) target = $region32
        $region31: #{tpu_custom_call.1} parent=11 // pred_region
          _
        $region32: #{tpu_custom_call.1} parent=11 // pred_fallthru
          _
        // Predicated region
        $region33: #{tpu_custom_call.1} parent=11 // pred_check
          %p221 = pneg %p165
        $region34: #{tpu_custom_call.1} parent=11 // pred_check_branch
          %223 = sbr.rel (%p221) target = $region36
        $region35: #{tpu_custom_call.1} parent=11 // pred_region
          _
        $region36: #{tpu_custom_call.1} parent=11 // pred_fallthru
          _
      $region12: #{tpu_custom_call.1} parent=5 // pred_fallthru
        _
      %p224 = scmp.lt.s32.totalorder %s13, 2
      // Predicated region
      $region37: #{tpu_custom_call.1} parent=5 // pred_check
        %p225 = pneg %p224
      $region38: #{tpu_custom_call.1} parent=5 // pred_check_branch
        %227 = sbr.rel (%p225) target = $region40
      $region39: #{tpu_custom_call.1} parent=5 // pred_region
        // Predicated region
        $region41: #{tpu_custom_call.1} parent=39 // pred_check
          %p228 = pneg %p33
        $region42: #{tpu_custom_call.1} parent=39 // pred_check_branch
          %230 = sbr.rel (%p228) target = $region44
        $region43: #{tpu_custom_call.1} parent=39 // pred_region
          %s231 = smul.u32 63, %s13
          %s232 = ssub.s32 125, %s231
          %p233 = scmp.lt.s32.totalorder %s232, 63
          %s234 = scalar_select %p233, %s232, 63
          %s235 = smul.u32 8, %s234
          %p236 = scmp.lt.s32.totalorder %s231, 124
          %s237 = scalar_select %p236, %s231, 124
          %s238 = smul.addr %s237, 8
          %s239 = scalar_lea.vmem %s0, %s238
          %s240 = smul.u32 63, %s13
          %s241 = ssub.s32 125, %s240
          %p242 = scmp.lt.s32.totalorder %s241, 63
          %s243 = scalar_select %p242, %s241, 63
          %s244 = smul.u32 8, %s243
        $region44: #{tpu_custom_call.1} parent=39 // pred_fallthru
          _
      $region40: #{tpu_custom_call.1} parent=5 // pred_fallthru
        _
      %p245 = scmp.le.s32.totalorder 1, %s13
      %p246 = scmp.lt.s32.totalorder %s13, 3
      %p247 = pnand %p245, %p246
      %p248 = pneg %p247
      // Predicated region
      $region45: #{tpu_custom_call.1} parent=5 // pred_check
        _
      $region46: #{tpu_custom_call.1} parent=5 // pred_check_branch
        %250 = sbr.rel (%p247) target = $region48
      $region47: #{tpu_custom_call.1} parent=5 // pred_region
        %s251 = ssub.s32 %s13, 1
        %s252 = smul.u32 63, %s18
        %s253 = ssub.s32 125, %s252
        %p254 = scmp.lt.s32.totalorder %s253, 63
        %s255 = scalar_select %p254, %s253, 63
        %s256 = smul.u32 8, %s255
        %p257 = scmp.lt.s32.totalorder %s252, 124
        %s258 = scalar_select %p257, %s252, 124
        %s259 = smul.addr %s258, 8
        %s260 = scalar_lea.vmem %s0, %s259
        %p261 = pneg %p39
        %p262 = pneg %p36
        %p263 = pneg %p60
        %p264 = pneg %p57
        %p265 = pneg %p81
        %p266 = pneg %p78
        %p267 = pneg %p102
        %p268 = pneg %p99
        %p269 = pneg %p123
        %p270 = pneg %p120
        %p271 = pneg %p144
        %p272 = pneg %p141
        %p273 = pneg %p165
        %p274 = pneg %p162
        %p275 = pneg %p191
        %p276 = pneg %p188
        %s277 = sand.u32 %s178, 1
        %s278 = sand.u32 %s178, 1
        %s279 = smul.addr %s278, 504
        %s280 = scalar_lea.vmem [#allocation2], %s279
        %s281 = smul.u32 63, %s18
        %s282 = ssub.s32 125, %s281
        %p283 = scmp.lt.s32.totalorder %s282, 63
        %s284 = scalar_select %p283, %s282, 63
        %s285 = smul.u32 8, %s284
        %p286 = scmp.lt.s32.totalorder %s281, 124
        %s287 = scalar_select %p286, %s281, 124
        %s288 = smul.addr %s287, 8
        %s289 = scalar_lea.vmem %s0, %s288
        %s290 = smul.u32 63, %s18
        %s291 = ssub.s32 125, %s290
        %p292 = scmp.lt.s32.totalorder %s291, 63
        %s293 = scalar_select %p292, %s291, 63
        %s294 = smul.u32 8, %s293
        %s295 = smul.u32 63, %s18
        %s296 = ssub.s32 125, %s295
        %p297 = scmp.lt.s32.totalorder %s296, 63
        %s298 = scalar_select %p297, %s296, 63
        %s299 = smul.u32 8, %s298
        %v300 = vld [vmem:[%s289] sm:$0xff]
        %v301 = vld [vmem:[%s289 + $0x8] sm:$0xff]
        %v302 = vld [vmem:[%s289 + $0x10] sm:$0xff]
        %v303 = vld [vmem:[%s289 + $0x18] sm:$0xff]
        %v304 = vld [vmem:[%s289 + $0x20] sm:$0xff]
        %v305 = vld [vmem:[%s289 + $0x28] sm:$0xff]
        %v306 = vld [vmem:[%s289 + $0x30] sm:$0xff]
        %v307 = vld [vmem:[%s289 + $0x38] sm:$0xff]
        %v308 = vld [vmem:[%s289 + $0x40] sm:$0xff]
        %v309 = vld [vmem:[%s289 + $0x48] sm:$0xff]
        %v310 = vld [vmem:[%s289 + $0x50] sm:$0xff]
        %v311 = vld [vmem:[%s289 + $0x58] sm:$0xff]
        %v312 = vld [vmem:[%s289 + $0x60] sm:$0xff]
        %v313 = vld [vmem:[%s289 + $0x68] sm:$0xff]
        %v314 = vld [vmem:[%s289 + $0x70] sm:$0xff]
        %v315 = vld [vmem:[%s289 + $0x78] sm:$0xff]
        %v316 = vld [vmem:[%s289 + $0x80] sm:$0xff]
        %v317 = vld [vmem:[%s289 + $0x88] sm:$0xff]
        %v318 = vld [vmem:[%s289 + $0x90] sm:$0xff]
        %v319 = vld [vmem:[%s289 + $0x98] sm:$0xff]
        %v320 = vld [vmem:[%s289 + $0xa0] sm:$0xff]
        %v321 = vld [vmem:[%s289 + $0xa8] sm:$0xff]
        %v322 = vld [vmem:[%s289 + $0xb0] sm:$0xff]
        %v323 = vld [vmem:[%s289 + $0xb8] sm:$0xff]
        %v324 = vld [vmem:[%s289 + $0xc0] sm:$0xff]
        %v325 = vld [vmem:[%s289 + $0xc8] sm:$0xff]
        %v326 = vld [vmem:[%s289 + $0xd0] sm:$0xff]
        %v327 = vld [vmem:[%s289 + $0xd8] sm:$0xff]
        %v328 = vld [vmem:[%s289 + $0xe0] sm:$0xff]
        %v329 = vld [vmem:[%s289 + $0xe8] sm:$0xff]
        %v330 = vld [vmem:[%s289 + $0xf0] sm:$0xff]
        %v331 = vld [vmem:[%s289 + $0xf8] sm:$0xff]
        %v332 = vld [vmem:[%s289 + $0x100] sm:$0xff]
        %v333 = vld [vmem:[%s289 + $0x108] sm:$0xff]
        %v334 = vld [vmem:[%s289 + $0x110] sm:$0xff]
        %v335 = vld [vmem:[%s289 + $0x118] sm:$0xff]
        %v336 = vld [vmem:[%s289 + $0x120] sm:$0xff]
        %v337 = vld [vmem:[%s289 + $0x128] sm:$0xff]
        %v338 = vld [vmem:[%s289 + $0x130] sm:$0xff]
        %v339 = vld [vmem:[%s289 + $0x138] sm:$0xff]
        %v340 = vld [vmem:[%s289 + $0x140] sm:$0xff]
        %v341 = vld [vmem:[%s289 + $0x148] sm:$0xff]
        %v342 = vld [vmem:[%s289 + $0x150] sm:$0xff]
        %v343 = vld [vmem:[%s289 + $0x158] sm:$0xff]
        %v344 = vld [vmem:[%s289 + $0x160] sm:$0xff]
        %v345 = vld [vmem:[%s289 + $0x168] sm:$0xff]
        %v346 = vld [vmem:[%s289 + $0x170] sm:$0xff]
        %v347 = vld [vmem:[%s289 + $0x178] sm:$0xff]
        %v348 = vld [vmem:[%s289 + $0x180] sm:$0xff]
        %v349 = vld [vmem:[%s289 + $0x188] sm:$0xff]
        %v350 = vld [vmem:[%s289 + $0x190] sm:$0xff]
        %v351 = vld [vmem:[%s289 + $0x198] sm:$0xff]
        %v352 = vld [vmem:[%s289 + $0x1a0] sm:$0xff]
        %v353 = vld [vmem:[%s289 + $0x1a8] sm:$0xff]
        %v354 = vld [vmem:[%s289 + $0x1b0] sm:$0xff]
        %v355 = vld [vmem:[%s289 + $0x1b8] sm:$0xff]
        %v356 = vld [vmem:[%s289 + $0x1c0] sm:$0xff]
        %v357 = vld [vmem:[%s289 + $0x1c8] sm:$0xff]
        %v358 = vld [vmem:[%s289 + $0x1d0] sm:$0xff]
        %v359 = vld [vmem:[%s289 + $0x1d8] sm:$0xff]
        %v360 = vld [vmem:[%s289 + $0x1e0] sm:$0xff]
        %v361 = vld [vmem:[%s289 + $0x1e8] sm:$0xff]
        %v362 = vld [vmem:[%s289 + $0x1f0] sm:$0xff]
        %v363 = vld [vmem:[%s1] sm:$0xff]
        %v364 = vld [vmem:[%s1 + $0x8] sm:$0xff]
        %v365 = vld [vmem:[%s1 + $0x10] sm:$0xff]
        %v366 = vld [vmem:[%s1 + $0x18] sm:$0xff]
        %vm367 = vcmask 130048
        %v369 = vsel %vm367, %v300, 0
        %v372 = vsel %vm367, %v301, 0
        %v375 = vsel %vm367, %v302, 0
        %v378 = vsel %vm367, %v303, 0
        %v381 = vsel %vm367, %v304, 0
        %v384 = vsel %vm367, %v305, 0
        %v387 = vsel %vm367, %v306, 0
        %v390 = vsel %vm367, %v307, 0
        %v393 = vsel %vm367, %v308, 0
        %v396 = vsel %vm367, %v309, 0
        %v399 = vsel %vm367, %v310, 0
        %v402 = vsel %vm367, %v311, 0
        %v405 = vsel %vm367, %v312, 0
        %v408 = vsel %vm367, %v313, 0
        %v411 = vsel %vm367, %v314, 0
        %v414 = vsel %vm367, %v315, 0
        %v417 = vsel %vm367, %v316, 0
        %v420 = vsel %vm367, %v317, 0
        %v423 = vsel %vm367, %v318, 0
        %v426 = vsel %vm367, %v319, 0
        %v429 = vsel %vm367, %v320, 0
        %v432 = vsel %vm367, %v321, 0
        %v435 = vsel %vm367, %v322, 0
        %v438 = vsel %vm367, %v323, 0
        %v441 = vsel %vm367, %v324, 0
        %v444 = vsel %vm367, %v325, 0
        %v447 = vsel %vm367, %v326, 0
        %v450 = vsel %vm367, %v327, 0
        %v453 = vsel %vm367, %v328, 0
        %v456 = vsel %vm367, %v329, 0
        %v459 = vsel %vm367, %v330, 0
        %v462 = vsel %vm367, %v331, 0
        %v465 = vsel %vm367, %v332, 0
        %v468 = vsel %vm367, %v333, 0
        %v471 = vsel %vm367, %v334, 0
        %v474 = vsel %vm367, %v335, 0
        %v477 = vsel %vm367, %v336, 0
        %v480 = vsel %vm367, %v337, 0
        %v483 = vsel %vm367, %v338, 0
        %v486 = vsel %vm367, %v339, 0
        %v489 = vsel %vm367, %v340, 0
        %v492 = vsel %vm367, %v341, 0
        %v495 = vsel %vm367, %v342, 0
        %v498 = vsel %vm367, %v343, 0
        %v501 = vsel %vm367, %v344, 0
        %v504 = vsel %vm367, %v345, 0
        %v507 = vsel %vm367, %v346, 0
        %v510 = vsel %vm367, %v347, 0
        %v513 = vsel %vm367, %v348, 0
        %v516 = vsel %vm367, %v349, 0
        %v519 = vsel %vm367, %v350, 0
        %v522 = vsel %vm367, %v351, 0
        %v525 = vsel %vm367, %v352, 0
        %v528 = vsel %vm367, %v353, 0
        %v531 = vsel %vm367, %v354, 0
        %v534 = vsel %vm367, %v355, 0
        %v537 = vsel %vm367, %v356, 0
        %v540 = vsel %vm367, %v357, 0
        %v543 = vsel %vm367, %v358, 0
        %v546 = vsel %vm367, %v359, 0
        %v549 = vsel %vm367, %v360, 0
        %v552 = vsel %vm367, %v361, 0
        %v555 = vsel %vm367, %v362, 0
        %557 = vmatpush.msra.mxu0 0.0
        %558 = vmatpush.msra.mxu0 0.0
        %559 = vmatpush.msra.mxu0 0.0
        %560 = vmatpush.msra.mxu0 0.0
        %561 = vmatpush.msra.mxu0 0.0
        %562 = vmatpush.msra.mxu0 0.0
        %563 = vmatpush.msra.mxu0 0.0
        %564 = vmatpush.msra.mxu0 0.0
        %565 = vmatpush.msra.mxu0 0.0
        %566 = vmatpush.msra.mxu0 0.0
        %567 = vmatpush.msra.mxu0 0.0
        %568 = vmatpush.msra.mxu0 0.0
        %569 = vmatpush.msra.mxu0 0.0
        %570 = vmatpush.msra.mxu0 0.0
        %571 = vmatpush.msra.mxu0 %v365
        %572 = vmatpush.msra.mxu0 %v363
        %573 = vmatmul.f32.gmra.mxu0 %v369
        %v574 = vpop.f32.mrf.mxu0
        %v575 = vadd.f32 0.0, %v574
        %576 = vmatmul.f32.gmra.mxu0 %v372
        %v577 = vpop.f32.mrf.mxu0
        %v578 = vadd.f32 0.0, %v577
        %579 = vmatmul.f32.gmra.mxu0 %v375
        %v580 = vpop.f32.mrf.mxu0
        %v581 = vadd.f32 0.0, %v580
        %582 = vmatmul.f32.gmra.mxu0 %v378
        %v583 = vpop.f32.mrf.mxu0
        %v584 = vadd.f32 0.0, %v583
        %585 = vmatmul.f32.gmra.mxu0 %v381
        %v586 = vpop.f32.mrf.mxu0
        %v587 = vadd.f32 0.0, %v586
        %588 = vmatmul.f32.gmra.mxu0 %v384
        %v589 = vpop.f32.mrf.mxu0
        %v590 = vadd.f32 0.0, %v589
        %591 = vmatmul.f32.gmra.mxu0 %v387
        %v592 = vpop.f32.mrf.mxu0
        %v593 = vadd.f32 0.0, %v592
        %594 = vmatmul.f32.gmra.mxu0 %v390
        %v595 = vpop.f32.mrf.mxu0
        %v596 = vadd.f32 0.0, %v595
        %597 = vmatmul.f32.gmra.mxu0 %v393
        %v598 = vpop.f32.mrf.mxu0
        %v599 = vadd.f32 0.0, %v598
        %600 = vmatmul.f32.gmra.mxu0 %v396
        %v601 = vpop.f32.mrf.mxu0
        %v602 = vadd.f32 0.0, %v601
        %603 = vmatmul.f32.gmra.mxu0 %v399
        %v604 = vpop.f32.mrf.mxu0
        %v605 = vadd.f32 0.0, %v604
        %606 = vmatmul.f32.gmra.mxu0 %v402
        %v607 = vpop.f32.mrf.mxu0
        %v608 = vadd.f32 0.0, %v607
        %609 = vmatmul.f32.gmra.mxu0 %v405
        %v610 = vpop.f32.mrf.mxu0
        %v611 = vadd.f32 0.0, %v610
        %612 = vmatmul.f32.gmra.mxu0 %v408
        %v613 = vpop.f32.mrf.mxu0
        %v614 = vadd.f32 0.0, %v613
        %615 = vmatmul.f32.gmra.mxu0 %v411
        %v616 = vpop.f32.mrf.mxu0
        %v617 = vadd.f32 0.0, %v616
        %618 = vmatmul.f32.gmra.mxu0 %v414
        %v619 = vpop.f32.mrf.mxu0
        %v620 = vadd.f32 0.0, %v619
        %621 = vmatmul.f32.gmra.mxu0 %v417
        %v622 = vpop.f32.mrf.mxu0
        %v623 = vadd.f32 0.0, %v622
        %624 = vmatmul.f32.gmra.mxu0 %v420
        %v625 = vpop.f32.mrf.mxu0
        %v626 = vadd.f32 0.0, %v625
        %627 = vmatmul.f32.gmra.mxu0 %v423
        %v628 = vpop.f32.mrf.mxu0
        %v629 = vadd.f32 0.0, %v628
        %630 = vmatmul.f32.gmra.mxu0 %v426
        %v631 = vpop.f32.mrf.mxu0
        %v632 = vadd.f32 0.0, %v631
        %633 = vmatmul.f32.gmra.mxu0 %v429
        %v634 = vpop.f32.mrf.mxu0
        %v635 = vadd.f32 0.0, %v634
        %636 = vmatmul.f32.gmra.mxu0 %v432
        %v637 = vpop.f32.mrf.mxu0
        %v638 = vadd.f32 0.0, %v637
        %639 = vmatmul.f32.gmra.mxu0 %v435
        %v640 = vpop.f32.mrf.mxu0
        %v641 = vadd.f32 0.0, %v640
        %642 = vmatmul.f32.gmra.mxu0 %v438
        %v643 = vpop.f32.mrf.mxu0
        %v644 = vadd.f32 0.0, %v643
        %645 = vmatmul.f32.gmra.mxu0 %v441
        %v646 = vpop.f32.mrf.mxu0
        %v647 = vadd.f32 0.0, %v646
        %648 = vmatmul.f32.gmra.mxu0 %v444
        %v649 = vpop.f32.mrf.mxu0
        %v650 = vadd.f32 0.0, %v649
        %651 = vmatmul.f32.gmra.mxu0 %v447
        %v652 = vpop.f32.mrf.mxu0
        %v653 = vadd.f32 0.0, %v652
        %654 = vmatmul.f32.gmra.mxu0 %v450
        %v655 = vpop.f32.mrf.mxu0
        %v656 = vadd.f32 0.0, %v655
        %657 = vmatmul.f32.gmra.mxu0 %v453
        %v658 = vpop.f32.mrf.mxu0
        %v659 = vadd.f32 0.0, %v658
        %660 = vmatmul.f32.gmra.mxu0 %v456
        %v661 = vpop.f32.mrf.mxu0
        %v662 = vadd.f32 0.0, %v661
        %663 = vmatmul.f32.gmra.mxu0 %v459
        %v664 = vpop.f32.mrf.mxu0
        %v665 = vadd.f32 0.0, %v664
        %666 = vmatmul.f32.gmra.mxu0 %v462
        %v667 = vpop.f32.mrf.mxu0
        %v668 = vadd.f32 0.0, %v667
        %669 = vmatmul.f32.gmra.mxu0 %v465
        %v670 = vpop.f32.mrf.mxu0
        %v671 = vadd.f32 0.0, %v670
        %672 = vmatmul.f32.gmra.mxu0 %v468
        %v673 = vpop.f32.mrf.mxu0
        %v674 = vadd.f32 0.0, %v673
        %675 = vmatmul.f32.gmra.mxu0 %v471
        %v676 = vpop.f32.mrf.mxu0
        %v677 = vadd.f32 0.0, %v676
        %678 = vmatmul.f32.gmra.mxu0 %v474
        %v679 = vpop.f32.mrf.mxu0
        %v680 = vadd.f32 0.0, %v679
        %681 = vmatmul.f32.gmra.mxu0 %v477
        %v682 = vpop.f32.mrf.mxu0
        %v683 = vadd.f32 0.0, %v682
        %684 = vmatmul.f32.gmra.mxu0 %v480
        %v685 = vpop.f32.mrf.mxu0
        %v686 = vadd.f32 0.0, %v685
        %687 = vmatmul.f32.gmra.mxu0 %v483
        %v688 = vpop.f32.mrf.mxu0
        %v689 = vadd.f32 0.0, %v688
        %690 = vmatmul.f32.gmra.mxu0 %v486
        %v691 = vpop.f32.mrf.mxu0
        %v692 = vadd.f32 0.0, %v691
        %693 = vmatmul.f32.gmra.mxu0 %v489
        %v694 = vpop.f32.mrf.mxu0
        %v695 = vadd.f32 0.0, %v694
        %696 = vmatmul.f32.gmra.mxu0 %v492
        %v697 = vpop.f32.mrf.mxu0
        %v698 = vadd.f32 0.0, %v697
        %699 = vmatmul.f32.gmra.mxu0 %v495
        %v700 = vpop.f32.mrf.mxu0
        %v701 = vadd.f32 0.0, %v700
        %702 = vmatmul.f32.gmra.mxu0 %v498
        %v703 = vpop.f32.mrf.mxu0
        %v704 = vadd.f32 0.0, %v703
        %705 = vmatmul.f32.gmra.mxu0 %v501
        %v706 = vpop.f32.mrf.mxu0
        %v707 = vadd.f32 0.0, %v706
        %708 = vmatmul.f32.gmra.mxu0 %v504
        %v709 = vpop.f32.mrf.mxu0
        %v710 = vadd.f32 0.0, %v709
        %711 = vmatmul.f32.gmra.mxu0 %v507
        %v712 = vpop.f32.mrf.mxu0
        %v713 = vadd.f32 0.0, %v712
        %714 = vmatmul.f32.gmra.mxu0 %v510
        %v715 = vpop.f32.mrf.mxu0
        %v716 = vadd.f32 0.0, %v715
        %717 = vmatmul.f32.gmra.mxu0 %v513
        %v718 = vpop.f32.mrf.mxu0
        %v719 = vadd.f32 0.0, %v718
        %720 = vmatmul.f32.gmra.mxu0 %v516
        %v721 = vpop.f32.mrf.mxu0
        %v722 = vadd.f32 0.0, %v721
        %723 = vmatmul.f32.gmra.mxu0 %v519
        %v724 = vpop.f32.mrf.mxu0
        %v725 = vadd.f32 0.0, %v724
        %726 = vmatmul.f32.gmra.mxu0 %v522
        %v727 = vpop.f32.mrf.mxu0
        %v728 = vadd.f32 0.0, %v727
        %729 = vmatmul.f32.gmra.mxu0 %v525
        %v730 = vpop.f32.mrf.mxu0
        %v731 = vadd.f32 0.0, %v730
        %732 = vmatmul.f32.gmra.mxu0 %v528
        %v733 = vpop.f32.mrf.mxu0
        %v734 = vadd.f32 0.0, %v733
        %735 = vmatmul.f32.gmra.mxu0 %v531
        %v736 = vpop.f32.mrf.mxu0
        %v737 = vadd.f32 0.0, %v736
        %738 = vmatmul.f32.gmra.mxu0 %v534
        %v739 = vpop.f32.mrf.mxu0
        %v740 = vadd.f32 0.0, %v739
        %741 = vmatmul.f32.gmra.mxu0 %v537
        %v742 = vpop.f32.mrf.mxu0
        %v743 = vadd.f32 0.0, %v742
        %744 = vmatmul.f32.gmra.mxu0 %v540
        %v745 = vpop.f32.mrf.mxu0
        %v746 = vadd.f32 0.0, %v745
        %747 = vmatmul.f32.gmra.mxu0 %v543
        %v748 = vpop.f32.mrf.mxu0
        %v749 = vadd.f32 0.0, %v748
        %750 = vmatmul.f32.gmra.mxu0 %v546
        %v751 = vpop.f32.mrf.mxu0
        %v752 = vadd.f32 0.0, %v751
        %753 = vmatmul.f32.gmra.mxu0 %v549
        %v754 = vpop.f32.mrf.mxu0
        %v755 = vadd.f32 0.0, %v754
        %756 = vmatmul.f32.gmra.mxu0 %v552
        %v757 = vpop.f32.mrf.mxu0
        %v758 = vadd.f32 0.0, %v757
        %759 = vmatmul.f32.gmra.mxu0 %v555
        %v760 = vpop.f32.mrf.mxu0
        %v761 = vadd.f32 0.0, %v760
        %762 = vdwg.mxu0
        %763 = vmatpush.msra.mxu0 0.0
        %764 = vmatpush.msra.mxu0 0.0
        %765 = vmatpush.msra.mxu0 0.0
        %766 = vmatpush.msra.mxu0 0.0
        %767 = vmatpush.msra.mxu0 0.0
        %768 = vmatpush.msra.mxu0 0.0
        %769 = vmatpush.msra.mxu0 0.0
        %770 = vmatpush.msra.mxu0 0.0
        %771 = vmatpush.msra.mxu0 0.0
        %772 = vmatpush.msra.mxu0 0.0
        %773 = vmatpush.msra.mxu0 0.0
        %774 = vmatpush.msra.mxu0 0.0
        %775 = vmatpush.msra.mxu0 0.0
        %776 = vmatpush.msra.mxu0 0.0
        %777 = vmatpush.msra.mxu0 %v366
        %778 = vmatpush.msra.mxu0 %v364
        %779 = vmatmul.f32.gmra.mxu0 %v369
        %v780 = vpop.f32.mrf.mxu0
        %v781 = vadd.f32 0.0, %v780
        %782 = vmatmul.f32.gmra.mxu0 %v372
        %v783 = vpop.f32.mrf.mxu0
        %v784 = vadd.f32 0.0, %v783
        %785 = vmatmul.f32.gmra.mxu0 %v375
        %v786 = vpop.f32.mrf.mxu0
        %v787 = vadd.f32 0.0, %v786
        %788 = vmatmul.f32.gmra.mxu0 %v378
        %v789 = vpop.f32.mrf.mxu0
        %v790 = vadd.f32 0.0, %v789
        %791 = vmatmul.f32.gmra.mxu0 %v381
        %v792 = vpop.f32.mrf.mxu0
        %v793 = vadd.f32 0.0, %v792
        %794 = vmatmul.f32.gmra.mxu0 %v384
        %v795 = vpop.f32.mrf.mxu0
        %v796 = vadd.f32 0.0, %v795
        %797 = vmatmul.f32.gmra.mxu0 %v387
        %v798 = vpop.f32.mrf.mxu0
        %v799 = vadd.f32 0.0, %v798
        %800 = vmatmul.f32.gmra.mxu0 %v390
        %v801 = vpop.f32.mrf.mxu0
        %v802 = vadd.f32 0.0, %v801
        %803 = vmatmul.f32.gmra.mxu0 %v393
        %v804 = vpop.f32.mrf.mxu0
        %v805 = vadd.f32 0.0, %v804
        %806 = vmatmul.f32.gmra.mxu0 %v396
        %v807 = vpop.f32.mrf.mxu0
        %v808 = vadd.f32 0.0, %v807
        %809 = vmatmul.f32.gmra.mxu0 %v399
        %v810 = vpop.f32.mrf.mxu0
        %v811 = vadd.f32 0.0, %v810
        %812 = vmatmul.f32.gmra.mxu0 %v402
        %v813 = vpop.f32.mrf.mxu0
        %v814 = vadd.f32 0.0, %v813
        %815 = vmatmul.f32.gmra.mxu0 %v405
        %v816 = vpop.f32.mrf.mxu0
        %v817 = vadd.f32 0.0, %v816
        %818 = vmatmul.f32.gmra.mxu0 %v408
        %v819 = vpop.f32.mrf.mxu0
        %v820 = vadd.f32 0.0, %v819
        %821 = vmatmul.f32.gmra.mxu0 %v411
        %v822 = vpop.f32.mrf.mxu0
        %v823 = vadd.f32 0.0, %v822
        %824 = vmatmul.f32.gmra.mxu0 %v414
        %v825 = vpop.f32.mrf.mxu0
        %v826 = vadd.f32 0.0, %v825
        %827 = vmatmul.f32.gmra.mxu0 %v417
        %v828 = vpop.f32.mrf.mxu0
        %v829 = vadd.f32 0.0, %v828
        %830 = vmatmul.f32.gmra.mxu0 %v420
        %v831 = vpop.f32.mrf.mxu0
        %v832 = vadd.f32 0.0, %v831
        %833 = vmatmul.f32.gmra.mxu0 %v423
        %v834 = vpop.f32.mrf.mxu0
        %v835 = vadd.f32 0.0, %v834
        %836 = vmatmul.f32.gmra.mxu0 %v426
        %v837 = vpop.f32.mrf.mxu0
        %v838 = vadd.f32 0.0, %v837
        %839 = vmatmul.f32.gmra.mxu0 %v429
        %v840 = vpop.f32.mrf.mxu0
        %v841 = vadd.f32 0.0, %v840
        %842 = vmatmul.f32.gmra.mxu0 %v432
        %v843 = vpop.f32.mrf.mxu0
        %v844 = vadd.f32 0.0, %v843
        %845 = vmatmul.f32.gmra.mxu0 %v435
        %v846 = vpop.f32.mrf.mxu0
        %v847 = vadd.f32 0.0, %v846
        %848 = vmatmul.f32.gmra.mxu0 %v438
        %v849 = vpop.f32.mrf.mxu0
        %v850 = vadd.f32 0.0, %v849
        %851 = vmatmul.f32.gmra.mxu0 %v441
        %v852 = vpop.f32.mrf.mxu0
        %v853 = vadd.f32 0.0, %v852
        %854 = vmatmul.f32.gmra.mxu0 %v444
        %v855 = vpop.f32.mrf.mxu0
        %v856 = vadd.f32 0.0, %v855
        %857 = vmatmul.f32.gmra.mxu0 %v447
        %v858 = vpop.f32.mrf.mxu0
        %v859 = vadd.f32 0.0, %v858
        %860 = vmatmul.f32.gmra.mxu0 %v450
        %v861 = vpop.f32.mrf.mxu0
        %v862 = vadd.f32 0.0, %v861
        %863 = vmatmul.f32.gmra.mxu0 %v453
        %v864 = vpop.f32.mrf.mxu0
        %v865 = vadd.f32 0.0, %v864
        %866 = vmatmul.f32.gmra.mxu0 %v456
        %v867 = vpop.f32.mrf.mxu0
        %v868 = vadd.f32 0.0, %v867
        %869 = vmatmul.f32.gmra.mxu0 %v459
        %v870 = vpop.f32.mrf.mxu0
        %v871 = vadd.f32 0.0, %v870
        %872 = vmatmul.f32.gmra.mxu0 %v462
        %v873 = vpop.f32.mrf.mxu0
        %v874 = vadd.f32 0.0, %v873
        %875 = vmatmul.f32.gmra.mxu0 %v465
        %v876 = vpop.f32.mrf.mxu0
        %v877 = vadd.f32 0.0, %v876
        %878 = vmatmul.f32.gmra.mxu0 %v468
        %v879 = vpop.f32.mrf.mxu0
        %v880 = vadd.f32 0.0, %v879
        %881 = vmatmul.f32.gmra.mxu0 %v471
        %v882 = vpop.f32.mrf.mxu0
        %v883 = vadd.f32 0.0, %v882
        %884 = vmatmul.f32.gmra.mxu0 %v474
        %v885 = vpop.f32.mrf.mxu0
        %v886 = vadd.f32 0.0, %v885
        %887 = vmatmul.f32.gmra.mxu0 %v477
        %v888 = vpop.f32.mrf.mxu0
        %v889 = vadd.f32 0.0, %v888
        %890 = vmatmul.f32.gmra.mxu0 %v480
        %v891 = vpop.f32.mrf.mxu0
        %v892 = vadd.f32 0.0, %v891
        %893 = vmatmul.f32.gmra.mxu0 %v483
        %v894 = vpop.f32.mrf.mxu0
        %v895 = vadd.f32 0.0, %v894
        %896 = vmatmul.f32.gmra.mxu0 %v486
        %v897 = vpop.f32.mrf.mxu0
        %v898 = vadd.f32 0.0, %v897
        %899 = vmatmul.f32.gmra.mxu0 %v489
        %v900 = vpop.f32.mrf.mxu0
        %v901 = vadd.f32 0.0, %v900
        %902 = vmatmul.f32.gmra.mxu0 %v492
        %v903 = vpop.f32.mrf.mxu0
        %v904 = vadd.f32 0.0, %v903
        %905 = vmatmul.f32.gmra.mxu0 %v495
        %v906 = vpop.f32.mrf.mxu0
        %v907 = vadd.f32 0.0, %v906
        %908 = vmatmul.f32.gmra.mxu0 %v498
        %v909 = vpop.f32.mrf.mxu0
        %v910 = vadd.f32 0.0, %v909
        %911 = vmatmul.f32.gmra.mxu0 %v501
        %v912 = vpop.f32.mrf.mxu0
        %v913 = vadd.f32 0.0, %v912
        %914 = vmatmul.f32.gmra.mxu0 %v504
        %v915 = vpop.f32.mrf.mxu0
        %v916 = vadd.f32 0.0, %v915
        %917 = vmatmul.f32.gmra.mxu0 %v507
        %v918 = vpop.f32.mrf.mxu0
        %v919 = vadd.f32 0.0, %v918
        %920 = vmatmul.f32.gmra.mxu0 %v510
        %v921 = vpop.f32.mrf.mxu0
        %v922 = vadd.f32 0.0, %v921
        %923 = vmatmul.f32.gmra.mxu0 %v513
        %v924 = vpop.f32.mrf.mxu0
        %v925 = vadd.f32 0.0, %v924
        %926 = vmatmul.f32.gmra.mxu0 %v516
        %v927 = vpop.f32.mrf.mxu0
        %v928 = vadd.f32 0.0, %v927
        %929 = vmatmul.f32.gmra.mxu0 %v519
        %v930 = vpop.f32.mrf.mxu0
        %v931 = vadd.f32 0.0, %v930
        %932 = vmatmul.f32.gmra.mxu0 %v522
        %v933 = vpop.f32.mrf.mxu0
        %v934 = vadd.f32 0.0, %v933
        %935 = vmatmul.f32.gmra.mxu0 %v525
        %v936 = vpop.f32.mrf.mxu0
        %v937 = vadd.f32 0.0, %v936
        %938 = vmatmul.f32.gmra.mxu0 %v528
        %v939 = vpop.f32.mrf.mxu0
        %v940 = vadd.f32 0.0, %v939
        %941 = vmatmul.f32.gmra.mxu0 %v531
        %v942 = vpop.f32.mrf.mxu0
        %v943 = vadd.f32 0.0, %v942
        %944 = vmatmul.f32.gmra.mxu0 %v534
        %v945 = vpop.f32.mrf.mxu0
        %v946 = vadd.f32 0.0, %v945
        %947 = vmatmul.f32.gmra.mxu0 %v537
        %v948 = vpop.f32.mrf.mxu0
        %v949 = vadd.f32 0.0, %v948
        %950 = vmatmul.f32.gmra.mxu0 %v540
        %v951 = vpop.f32.mrf.mxu0
        %v952 = vadd.f32 0.0, %v951
        %953 = vmatmul.f32.gmra.mxu0 %v543
        %v954 = vpop.f32.mrf.mxu0
        %v955 = vadd.f32 0.0, %v954
        %956 = vmatmul.f32.gmra.mxu0 %v546
        %v957 = vpop.f32.mrf.mxu0
        %v958 = vadd.f32 0.0, %v957
        %959 = vmatmul.f32.gmra.mxu0 %v549
        %v960 = vpop.f32.mrf.mxu0
        %v961 = vadd.f32 0.0, %v960
        %962 = vmatmul.f32.gmra.mxu0 %v552
        %v963 = vpop.f32.mrf.mxu0
        %v964 = vadd.f32 0.0, %v963
        %965 = vmatmul.f32.gmra.mxu0 %v555
        %v966 = vpop.f32.mrf.mxu0
        %v967 = vadd.f32 0.0, %v966
        %968 = vdwg.mxu0
        %v969 = vld [vmem:[%s2] sm:$0x1]
        %v971 = vperm.slane %v969, 0
        %v973 = vadd.f32 %v781, %v971
        %v974 = vadd.f32 %v784, %v971
        %v975 = vadd.f32 %v787, %v971
        %v976 = vadd.f32 %v790, %v971
        %v977 = vadd.f32 %v793, %v971
        %v978 = vadd.f32 %v796, %v971
        %v979 = vadd.f32 %v799, %v971
        %v980 = vadd.f32 %v802, %v971
        %v981 = vadd.f32 %v805, %v971
        %v982 = vadd.f32 %v808, %v971
        %v983 = vadd.f32 %v811, %v971
        %v984 = vadd.f32 %v814, %v971
        %v985 = vadd.f32 %v817, %v971
        %v986 = vadd.f32 %v820, %v971
        %v987 = vadd.f32 %v823, %v971
        %v988 = vadd.f32 %v826, %v971
        %v989 = vadd.f32 %v829, %v971
        %v990 = vadd.f32 %v832, %v971
        %v991 = vadd.f32 %v835, %v971
        %v992 = vadd.f32 %v838, %v971
        %v993 = vadd.f32 %v841, %v971
        %v994 = vadd.f32 %v844, %v971
        %v995 = vadd.f32 %v847, %v971
        %v996 = vadd.f32 %v850, %v971
        %v997 = vadd.f32 %v853, %v971
        %v998 = vadd.f32 %v856, %v971
        %v999 = vadd.f32 %v859, %v971
        %v1000 = vadd.f32 %v862, %v971
        %v1001 = vadd.f32 %v865, %v971
        %v1002 = vadd.f32 %v868, %v971
        %v1003 = vadd.f32 %v871, %v971
        %v1004 = vadd.f32 %v874, %v971
        %v1005 = vadd.f32 %v877, %v971
        %v1006 = vadd.f32 %v880, %v971
        %v1007 = vadd.f32 %v883, %v971
        %v1008 = vadd.f32 %v886, %v971
        %v1009 = vadd.f32 %v889, %v971
        %v1010 = vadd.f32 %v892, %v971
        %v1011 = vadd.f32 %v895, %v971
        %v1012 = vadd.f32 %v898, %v971
        %v1013 = vadd.f32 %v901, %v971
        %v1014 = vadd.f32 %v904, %v971
        %v1015 = vadd.f32 %v907, %v971
        %v1016 = vadd.f32 %v910, %v971
        %v1017 = vadd.f32 %v913, %v971
        %v1018 = vadd.f32 %v916, %v971
        %v1019 = vadd.f32 %v919, %v971
        %v1020 = vadd.f32 %v922, %v971
        %v1021 = vadd.f32 %v925, %v971
        %v1022 = vadd.f32 %v928, %v971
        %v1023 = vadd.f32 %v931, %v971
        %v1024 = vadd.f32 %v934, %v971
        %v1025 = vadd.f32 %v937, %v971
        %v1026 = vadd.f32 %v940, %v971
        %v1027 = vadd.f32 %v943, %v971
        %v1028 = vadd.f32 %v946, %v971
        %v1029 = vadd.f32 %v949, %v971
        %v1030 = vadd.f32 %v952, %v971
        %v1031 = vadd.f32 %v955, %v971
        %v1032 = vadd.f32 %v958, %v971
        %v1033 = vadd.f32 %v961, %v971
        %v1034 = vadd.f32 %v964, %v971
        %v1035 = vadd.f32 %v967, %v971
        %v1036 = vmax.f32 %v973, 0.0
        %v1037 = vmax.f32 %v974, 0.0
        %v1038 = vmax.f32 %v975, 0.0
        %v1039 = vmax.f32 %v976, 0.0
        %v1040 = vmax.f32 %v977, 0.0
        %v1041 = vmax.f32 %v978, 0.0
        %v1042 = vmax.f32 %v979, 0.0
        %v1043 = vmax.f32 %v980, 0.0
        %v1044 = vmax.f32 %v981, 0.0
        %v1045 = vmax.f32 %v982, 0.0
        %v1046 = vmax.f32 %v983, 0.0
        %v1047 = vmax.f32 %v984, 0.0
        %v1048 = vmax.f32 %v985, 0.0
        %v1049 = vmax.f32 %v986, 0.0
        %v1050 = vmax.f32 %v987, 0.0
        %v1051 = vmax.f32 %v988, 0.0
        %v1052 = vmax.f32 %v989, 0.0
        %v1053 = vmax.f32 %v990, 0.0
        %v1054 = vmax.f32 %v991, 0.0
        %v1055 = vmax.f32 %v992, 0.0
        %v1056 = vmax.f32 %v993, 0.0
        %v1057 = vmax.f32 %v994, 0.0
        %v1058 = vmax.f32 %v995, 0.0
        %v1059 = vmax.f32 %v996, 0.0
        %v1060 = vmax.f32 %v997, 0.0
        %v1061 = vmax.f32 %v998, 0.0
        %v1062 = vmax.f32 %v999, 0.0
        %v1063 = vmax.f32 %v1000, 0.0
        %v1064 = vmax.f32 %v1001, 0.0
        %v1065 = vmax.f32 %v1002, 0.0
        %v1066 = vmax.f32 %v1003, 0.0
        %v1067 = vmax.f32 %v1004, 0.0
        %v1068 = vmax.f32 %v1005, 0.0
        %v1069 = vmax.f32 %v1006, 0.0
        %v1070 = vmax.f32 %v1007, 0.0
        %v1071 = vmax.f32 %v1008, 0.0
        %v1072 = vmax.f32 %v1009, 0.0
        %v1073 = vmax.f32 %v1010, 0.0
        %v1074 = vmax.f32 %v1011, 0.0
        %v1075 = vmax.f32 %v1012, 0.0
        %v1076 = vmax.f32 %v1013, 0.0
        %v1077 = vmax.f32 %v1014, 0.0
        %v1078 = vmax.f32 %v1015, 0.0
        %v1079 = vmax.f32 %v1016, 0.0
        %v1080 = vmax.f32 %v1017, 0.0
        %v1081 = vmax.f32 %v1018, 0.0
        %v1082 = vmax.f32 %v1019, 0.0
        %v1083 = vmax.f32 %v1020, 0.0
        %v1084 = vmax.f32 %v1021, 0.0
        %v1085 = vmax.f32 %v1022, 0.0
        %v1086 = vmax.f32 %v1023, 0.0
        %v1087 = vmax.f32 %v1024, 0.0
        %v1088 = vmax.f32 %v1025, 0.0
        %v1089 = vmax.f32 %v1026, 0.0
        %v1090 = vmax.f32 %v1027, 0.0
        %v1091 = vmax.f32 %v1028, 0.0
        %v1092 = vmax.f32 %v1029, 0.0
        %v1093 = vmax.f32 %v1030, 0.0
        %v1094 = vmax.f32 %v1031, 0.0
        %v1095 = vmax.f32 %v1032, 0.0
        %v1096 = vmax.f32 %v1033, 0.0
        %v1097 = vmax.f32 %v1034, 0.0
        %v1098 = vmax.f32 %v1035, 0.0
        %v1099 = vld [vmem:[%s3] sm:$0xff]
        %v1100 = vld [vmem:[%s3 + $0x8] sm:$0xff]
        %v1101 = vld [vmem:[%s3 + $0x10] sm:$0xff]
        %v1102 = vld [vmem:[%s3 + $0x18] sm:$0xff]
        %v1103 = vld [vmem:[%s4] sm:$0x1]
        %v1105 = vperm.slane %v1103, 0
        %vm1107 = vcmask 261120
        %v1109 = vsel %vm1107, %v1036, 0
        %v1112 = vsel %vm1107, %v1037, 0
        %v1115 = vsel %vm1107, %v1038, 0
        %v1118 = vsel %vm1107, %v1039, 0
        %v1121 = vsel %vm1107, %v1040, 0
        %v1124 = vsel %vm1107, %v1041, 0
        %v1127 = vsel %vm1107, %v1042, 0
        %v1130 = vsel %vm1107, %v1043, 0
        %v1133 = vsel %vm1107, %v1044, 0
        %v1136 = vsel %vm1107, %v1045, 0
        %v1139 = vsel %vm1107, %v1046, 0
        %v1142 = vsel %vm1107, %v1047, 0
        %v1145 = vsel %vm1107, %v1048, 0
        %v1148 = vsel %vm1107, %v1049, 0
        %v1151 = vsel %vm1107, %v1050, 0
        %v1154 = vsel %vm1107, %v1051, 0
        %v1157 = vsel %vm1107, %v1052, 0
        %v1160 = vsel %vm1107, %v1053, 0
        %v1163 = vsel %vm1107, %v1054, 0
        %v1166 = vsel %vm1107, %v1055, 0
        %v1169 = vsel %vm1107, %v1056, 0
        %v1172 = vsel %vm1107, %v1057, 0
        %v1175 = vsel %vm1107, %v1058, 0
        %v1178 = vsel %vm1107, %v1059, 0
        %v1181 = vsel %vm1107, %v1060, 0
        %v1184 = vsel %vm1107, %v1061, 0
        %v1187 = vsel %vm1107, %v1062, 0
        %v1190 = vsel %vm1107, %v1063, 0
        %v1193 = vsel %vm1107, %v1064, 0
        %v1196 = vsel %vm1107, %v1065, 0
        %v1199 = vsel %vm1107, %v1066, 0
        %v1202 = vsel %vm1107, %v1067, 0
        %v1205 = vsel %vm1107, %v1068, 0
        %v1208 = vsel %vm1107, %v1069, 0
        %v1211 = vsel %vm1107, %v1070, 0
        %v1214 = vsel %vm1107, %v1071, 0
        %v1217 = vsel %vm1107, %v1072, 0
        %v1220 = vsel %vm1107, %v1073, 0
        %v1223 = vsel %vm1107, %v1074, 0
        %v1226 = vsel %vm1107, %v1075, 0
        %v1229 = vsel %vm1107, %v1076, 0
        %v1232 = vsel %vm1107, %v1077, 0
        %v1235 = vsel %vm1107, %v1078, 0
        %v1238 = vsel %vm1107, %v1079, 0
        %v1241 = vsel %vm1107, %v1080, 0
        %v1244 = vsel %vm1107, %v1081, 0
        %v1247 = vsel %vm1107, %v1082, 0
        %v1250 = vsel %vm1107, %v1083, 0
        %v1253 = vsel %vm1107, %v1084, 0
        %v1256 = vsel %vm1107, %v1085, 0
        %v1259 = vsel %vm1107, %v1086, 0
        %v1262 = vsel %vm1107, %v1087, 0
        %v1265 = vsel %vm1107, %v1088, 0
        %v1268 = vsel %vm1107, %v1089, 0
        %v1271 = vsel %vm1107, %v1090, 0
        %v1274 = vsel %vm1107, %v1091, 0
        %v1277 = vsel %vm1107, %v1092, 0
        %v1280 = vsel %vm1107, %v1093, 0
        %v1283 = vsel %vm1107, %v1094, 0
        %v1286 = vsel %vm1107, %v1095, 0
        %v1289 = vsel %vm1107, %v1096, 0
        %v1292 = vsel %vm1107, %v1097, 0
        %v1295 = vsel %vm1107, %v1098, 0
        %1297 = vmatpush.msra.mxu0 0.0
        %1298 = vmatpush.msra.mxu0 0.0
        %1299 = vmatpush.msra.mxu0 0.0
        %1300 = vmatpush.msra.mxu0 0.0
        %1301 = vmatpush.msra.mxu0 0.0
        %1302 = vmatpush.msra.mxu0 0.0
        %1303 = vmatpush.msra.mxu0 0.0
        %1304 = vmatpush.msra.mxu0 0.0
        %1305 = vmatpush.msra.mxu0 0.0
        %1306 = vmatpush.msra.mxu0 0.0
        %1307 = vmatpush.msra.mxu0 0.0
        %1308 = vmatpush.msra.mxu0 0.0
        %1309 = vmatpush.msra.mxu0 %v1102
        %1310 = vmatpush.msra.mxu0 %v1101
        %1311 = vmatpush.msra.mxu0 %v1100
        %1312 = vmatpush.msra.mxu0 %v1099
        %1313 = vmatmul.f32.gmra.mxu0 %v1109
        %v1314 = vpop.f32.mrf.mxu0
        %v1315 = vadd.f32 %v1105, %v1314
        %1316 = vmatmul.f32.gmra.mxu0 %v1112
        %v1317 = vpop.f32.mrf.mxu0
        %v1318 = vadd.f32 %v1105, %v1317
        %1319 = vmatmul.f32.gmra.mxu0 %v1115
        %v1320 = vpop.f32.mrf.mxu0
        %v1321 = vadd.f32 %v1105, %v1320
        %1322 = vmatmul.f32.gmra.mxu0 %v1118
        %v1323 = vpop.f32.mrf.mxu0
        %v1324 = vadd.f32 %v1105, %v1323
        %1325 = vmatmul.f32.gmra.mxu0 %v1121
        %v1326 = vpop.f32.mrf.mxu0
        %v1327 = vadd.f32 %v1105, %v1326
        %1328 = vmatmul.f32.gmra.mxu0 %v1124
        %v1329 = vpop.f32.mrf.mxu0
        %v1330 = vadd.f32 %v1105, %v1329
        %1331 = vmatmul.f32.gmra.mxu0 %v1127
        %v1332 = vpop.f32.mrf.mxu0
        %v1333 = vadd.f32 %v1105, %v1332
        %1334 = vmatmul.f32.gmra.mxu0 %v1130
        %v1335 = vpop.f32.mrf.mxu0
        %v1336 = vadd.f32 %v1105, %v1335
        %1337 = vmatmul.f32.gmra.mxu0 %v1133
        %v1338 = vpop.f32.mrf.mxu0
        %v1339 = vadd.f32 %v1105, %v1338
        %1340 = vmatmul.f32.gmra.mxu0 %v1136
        %v1341 = vpop.f32.mrf.mxu0
        %v1342 = vadd.f32 %v1105, %v1341
        %1343 = vmatmul.f32.gmra.mxu0 %v1139
        %v1344 = vpop.f32.mrf.mxu0
        %v1345 = vadd.f32 %v1105, %v1344
        %1346 = vmatmul.f32.gmra.mxu0 %v1142
        %v1347 = vpop.f32.mrf.mxu0
        %v1348 = vadd.f32 %v1105, %v1347
        %1349 = vmatmul.f32.gmra.mxu0 %v1145
        %v1350 = vpop.f32.mrf.mxu0
        %v1351 = vadd.f32 %v1105, %v1350
        %1352 = vmatmul.f32.gmra.mxu0 %v1148
        %v1353 = vpop.f32.mrf.mxu0
        %v1354 = vadd.f32 %v1105, %v1353
        %1355 = vmatmul.f32.gmra.mxu0 %v1151
        %v1356 = vpop.f32.mrf.mxu0
        %v1357 = vadd.f32 %v1105, %v1356
        %1358 = vmatmul.f32.gmra.mxu0 %v1154
        %v1359 = vpop.f32.mrf.mxu0
        %v1360 = vadd.f32 %v1105, %v1359
        %1361 = vmatmul.f32.gmra.mxu0 %v1157
        %v1362 = vpop.f32.mrf.mxu0
        %v1363 = vadd.f32 %v1105, %v1362
        %1364 = vmatmul.f32.gmra.mxu0 %v1160
        %v1365 = vpop.f32.mrf.mxu0
        %v1366 = vadd.f32 %v1105, %v1365
        %1367 = vmatmul.f32.gmra.mxu0 %v1163
        %v1368 = vpop.f32.mrf.mxu0
        %v1369 = vadd.f32 %v1105, %v1368
        %1370 = vmatmul.f32.gmra.mxu0 %v1166
        %v1371 = vpop.f32.mrf.mxu0
        %v1372 = vadd.f32 %v1105, %v1371
        %1373 = vmatmul.f32.gmra.mxu0 %v1169
        %v1374 = vpop.f32.mrf.mxu0
        %v1375 = vadd.f32 %v1105, %v1374
        %1376 = vmatmul.f32.gmra.mxu0 %v1172
        %v1377 = vpop.f32.mrf.mxu0
        %v1378 = vadd.f32 %v1105, %v1377
        %1379 = vmatmul.f32.gmra.mxu0 %v1175
        %v1380 = vpop.f32.mrf.mxu0
        %v1381 = vadd.f32 %v1105, %v1380
        %1382 = vmatmul.f32.gmra.mxu0 %v1178
        %v1383 = vpop.f32.mrf.mxu0
        %v1384 = vadd.f32 %v1105, %v1383
        %1385 = vmatmul.f32.gmra.mxu0 %v1181
        %v1386 = vpop.f32.mrf.mxu0
        %v1387 = vadd.f32 %v1105, %v1386
        %1388 = vmatmul.f32.gmra.mxu0 %v1184
        %v1389 = vpop.f32.mrf.mxu0
        %v1390 = vadd.f32 %v1105, %v1389
        %1391 = vmatmul.f32.gmra.mxu0 %v1187
        %v1392 = vpop.f32.mrf.mxu0
        %v1393 = vadd.f32 %v1105, %v1392
        %1394 = vmatmul.f32.gmra.mxu0 %v1190
        %v1395 = vpop.f32.mrf.mxu0
        %v1396 = vadd.f32 %v1105, %v1395
        %1397 = vmatmul.f32.gmra.mxu0 %v1193
        %v1398 = vpop.f32.mrf.mxu0
        %v1399 = vadd.f32 %v1105, %v1398
        %1400 = vmatmul.f32.gmra.mxu0 %v1196
        %v1401 = vpop.f32.mrf.mxu0
        %v1402 = vadd.f32 %v1105, %v1401
        %1403 = vmatmul.f32.gmra.mxu0 %v1199
        %v1404 = vpop.f32.mrf.mxu0
        %v1405 = vadd.f32 %v1105, %v1404
        %1406 = vmatmul.f32.gmra.mxu0 %v1202
        %v1407 = vpop.f32.mrf.mxu0
        %v1408 = vadd.f32 %v1105, %v1407
        %1409 = vmatmul.f32.gmra.mxu0 %v1205
        %v1410 = vpop.f32.mrf.mxu0
        %v1411 = vadd.f32 %v1105, %v1410
        %1412 = vmatmul.f32.gmra.mxu0 %v1208
        %v1413 = vpop.f32.mrf.mxu0
        %v1414 = vadd.f32 %v1105, %v1413
        %1415 = vmatmul.f32.gmra.mxu0 %v1211
        %v1416 = vpop.f32.mrf.mxu0
        %v1417 = vadd.f32 %v1105, %v1416
        %1418 = vmatmul.f32.gmra.mxu0 %v1214
        %v1419 = vpop.f32.mrf.mxu0
        %v1420 = vadd.f32 %v1105, %v1419
        %1421 = vmatmul.f32.gmra.mxu0 %v1217
        %v1422 = vpop.f32.mrf.mxu0
        %v1423 = vadd.f32 %v1105, %v1422
        %1424 = vmatmul.f32.gmra.mxu0 %v1220
        %v1425 = vpop.f32.mrf.mxu0
        %v1426 = vadd.f32 %v1105, %v1425
        %1427 = vmatmul.f32.gmra.mxu0 %v1223
        %v1428 = vpop.f32.mrf.mxu0
        %v1429 = vadd.f32 %v1105, %v1428
        %1430 = vmatmul.f32.gmra.mxu0 %v1226
        %v1431 = vpop.f32.mrf.mxu0
        %v1432 = vadd.f32 %v1105, %v1431
        %1433 = vmatmul.f32.gmra.mxu0 %v1229
        %v1434 = vpop.f32.mrf.mxu0
        %v1435 = vadd.f32 %v1105, %v1434
        %1436 = vmatmul.f32.gmra.mxu0 %v1232
        %v1437 = vpop.f32.mrf.mxu0
        %v1438 = vadd.f32 %v1105, %v1437
        %1439 = vmatmul.f32.gmra.mxu0 %v1235
        %v1440 = vpop.f32.mrf.mxu0
        %v1441 = vadd.f32 %v1105, %v1440
        %1442 = vmatmul.f32.gmra.mxu0 %v1238
        %v1443 = vpop.f32.mrf.mxu0
        %v1444 = vadd.f32 %v1105, %v1443
        %1445 = vmatmul.f32.gmra.mxu0 %v1241
        %v1446 = vpop.f32.mrf.mxu0
        %v1447 = vadd.f32 %v1105, %v1446
        %1448 = vmatmul.f32.gmra.mxu0 %v1244
        %v1449 = vpop.f32.mrf.mxu0
        %v1450 = vadd.f32 %v1105, %v1449
        %1451 = vmatmul.f32.gmra.mxu0 %v1247
        %v1452 = vpop.f32.mrf.mxu0
        %v1453 = vadd.f32 %v1105, %v1452
        %1454 = vmatmul.f32.gmra.mxu0 %v1250
        %v1455 = vpop.f32.mrf.mxu0
        %v1456 = vadd.f32 %v1105, %v1455
        %1457 = vmatmul.f32.gmra.mxu0 %v1253
        %v1458 = vpop.f32.mrf.mxu0
        %v1459 = vadd.f32 %v1105, %v1458
        %1460 = vmatmul.f32.gmra.mxu0 %v1256
        %v1461 = vpop.f32.mrf.mxu0
        %v1462 = vadd.f32 %v1105, %v1461
        %1463 = vmatmul.f32.gmra.mxu0 %v1259
        %v1464 = vpop.f32.mrf.mxu0
        %v1465 = vadd.f32 %v1105, %v1464
        %1466 = vmatmul.f32.gmra.mxu0 %v1262
        %v1467 = vpop.f32.mrf.mxu0
        %v1468 = vadd.f32 %v1105, %v1467
        %1469 = vmatmul.f32.gmra.mxu0 %v1265
        %v1470 = vpop.f32.mrf.mxu0
        %v1471 = vadd.f32 %v1105, %v1470
        %1472 = vmatmul.f32.gmra.mxu0 %v1268
        %v1473 = vpop.f32.mrf.mxu0
        %v1474 = vadd.f32 %v1105, %v1473
        %1475 = vmatmul.f32.gmra.mxu0 %v1271
        %v1476 = vpop.f32.mrf.mxu0
        %v1477 = vadd.f32 %v1105, %v1476
        %1478 = vmatmul.f32.gmra.mxu0 %v1274
        %v1479 = vpop.f32.mrf.mxu0
        %v1480 = vadd.f32 %v1105, %v1479
        %1481 = vmatmul.f32.gmra.mxu0 %v1277
        %v1482 = vpop.f32.mrf.mxu0
        %v1483 = vadd.f32 %v1105, %v1482
        %1484 = vmatmul.f32.gmra.mxu0 %v1280
        %v1485 = vpop.f32.mrf.mxu0
        %v1486 = vadd.f32 %v1105, %v1485
        %1487 = vmatmul.f32.gmra.mxu0 %v1283
        %v1488 = vpop.f32.mrf.mxu0
        %v1489 = vadd.f32 %v1105, %v1488
        %1490 = vmatmul.f32.gmra.mxu0 %v1286
        %v1491 = vpop.f32.mrf.mxu0
        %v1492 = vadd.f32 %v1105, %v1491
        %1493 = vmatmul.f32.gmra.mxu0 %v1289
        %v1494 = vpop.f32.mrf.mxu0
        %v1495 = vadd.f32 %v1105, %v1494
        %1496 = vmatmul.f32.gmra.mxu0 %v1292
        %v1497 = vpop.f32.mrf.mxu0
        %v1498 = vadd.f32 %v1105, %v1497
        %1499 = vmatmul.f32.gmra.mxu0 %v1295
        %v1500 = vpop.f32.mrf.mxu0
        %v1501 = vadd.f32 %v1105, %v1500
        %1502 = vdwg.mxu0
        %v1503 = vmax.f32 %v1315, 0.0
        %v1504 = vmax.f32 %v1318, 0.0
        %v1505 = vmax.f32 %v1321, 0.0
        %v1506 = vmax.f32 %v1324, 0.0
        %v1507 = vmax.f32 %v1327, 0.0
        %v1508 = vmax.f32 %v1330, 0.0
        %v1509 = vmax.f32 %v1333, 0.0
        %v1510 = vmax.f32 %v1336, 0.0
        %v1511 = vmax.f32 %v1339, 0.0
        %v1512 = vmax.f32 %v1342, 0.0
        %v1513 = vmax.f32 %v1345, 0.0
        %v1514 = vmax.f32 %v1348, 0.0
        %v1515 = vmax.f32 %v1351, 0.0
        %v1516 = vmax.f32 %v1354, 0.0
        %v1517 = vmax.f32 %v1357, 0.0
        %v1518 = vmax.f32 %v1360, 0.0
        %v1519 = vmax.f32 %v1363, 0.0
        %v1520 = vmax.f32 %v1366, 0.0
        %v1521 = vmax.f32 %v1369, 0.0
        %v1522 = vmax.f32 %v1372, 0.0
        %v1523 = vmax.f32 %v1375, 0.0
        %v1524 = vmax.f32 %v1378, 0.0
        %v1525 = vmax.f32 %v1381, 0.0
        %v1526 = vmax.f32 %v1384, 0.0
        %v1527 = vmax.f32 %v1387, 0.0
        %v1528 = vmax.f32 %v1390, 0.0
        %v1529 = vmax.f32 %v1393, 0.0
        %v1530 = vmax.f32 %v1396, 0.0
        %v1531 = vmax.f32 %v1399, 0.0
        %v1532 = vmax.f32 %v1402, 0.0
        %v1533 = vmax.f32 %v1405, 0.0
        %v1534 = vmax.f32 %v1408, 0.0
        %v1535 = vmax.f32 %v1411, 0.0
        %v1536 = vmax.f32 %v1414, 0.0
        %v1537 = vmax.f32 %v1417, 0.0
        %v1538 = vmax.f32 %v1420, 0.0
        %v1539 = vmax.f32 %v1423, 0.0
        %v1540 = vmax.f32 %v1426, 0.0
        %v1541 = vmax.f32 %v1429, 0.0
        %v1542 = vmax.f32 %v1432, 0.0
        %v1543 = vmax.f32 %v1435, 0.0
        %v1544 = vmax.f32 %v1438, 0.0
        %v1545 = vmax.f32 %v1441, 0.0
        %v1546 = vmax.f32 %v1444, 0.0
        %v1547 = vmax.f32 %v1447, 0.0
        %v1548 = vmax.f32 %v1450, 0.0
        %v1549 = vmax.f32 %v1453, 0.0
        %v1550 = vmax.f32 %v1456, 0.0
        %v1551 = vmax.f32 %v1459, 0.0
        %v1552 = vmax.f32 %v1462, 0.0
        %v1553 = vmax.f32 %v1465, 0.0
        %v1554 = vmax.f32 %v1468, 0.0
        %v1555 = vmax.f32 %v1471, 0.0
        %v1556 = vmax.f32 %v1474, 0.0
        %v1557 = vmax.f32 %v1477, 0.0
        %v1558 = vmax.f32 %v1480, 0.0
        %v1559 = vmax.f32 %v1483, 0.0
        %v1560 = vmax.f32 %v1486, 0.0
        %v1561 = vmax.f32 %v1489, 0.0
        %v1562 = vmax.f32 %v1492, 0.0
        %v1563 = vmax.f32 %v1495, 0.0
        %v1564 = vmax.f32 %v1498, 0.0
        %v1565 = vmax.f32 %v1501, 0.0
        %v1566 = vld [vmem:[%s5] sm:$0xff]
        %v1567 = vld [vmem:[%s5 + $0x8] sm:$0xff]
        %v1568 = vld [vmem:[%s5 + $0x10] sm:$0xff]
        %v1569 = vld [vmem:[%s5 + $0x18] sm:$0xff]
        %v1571 = vsel %vm1107, %v1503, 0
        %v1574 = vsel %vm1107, %v1504, 0
        %v1577 = vsel %vm1107, %v1505, 0
        %v1580 = vsel %vm1107, %v1506, 0
        %v1583 = vsel %vm1107, %v1507, 0
        %v1586 = vsel %vm1107, %v1508, 0
        %v1589 = vsel %vm1107, %v1509, 0
        %v1592 = vsel %vm1107, %v1510, 0
        %v1595 = vsel %vm1107, %v1511, 0
        %v1598 = vsel %vm1107, %v1512, 0
        %v1601 = vsel %vm1107, %v1513, 0
        %v1604 = vsel %vm1107, %v1514, 0
        %v1607 = vsel %vm1107, %v1515, 0
        %v1610 = vsel %vm1107, %v1516, 0
        %v1613 = vsel %vm1107, %v1517, 0
        %v1616 = vsel %vm1107, %v1518, 0
        %v1619 = vsel %vm1107, %v1519, 0
        %v1622 = vsel %vm1107, %v1520, 0
        %v1625 = vsel %vm1107, %v1521, 0
        %v1628 = vsel %vm1107, %v1522, 0
        %v1631 = vsel %vm1107, %v1523, 0
        %v1634 = vsel %vm1107, %v1524, 0
        %v1637 = vsel %vm1107, %v1525, 0
        %v1640 = vsel %vm1107, %v1526, 0
        %v1643 = vsel %vm1107, %v1527, 0
        %v1646 = vsel %vm1107, %v1528, 0
        %v1649 = vsel %vm1107, %v1529, 0
        %v1652 = vsel %vm1107, %v1530, 0
        %v1655 = vsel %vm1107, %v1531, 0
        %v1658 = vsel %vm1107, %v1532, 0
        %v1661 = vsel %vm1107, %v1533, 0
        %v1664 = vsel %vm1107, %v1534, 0
        %v1667 = vsel %vm1107, %v1535, 0
        %v1670 = vsel %vm1107, %v1536, 0
        %v1673 = vsel %vm1107, %v1537, 0
        %v1676 = vsel %vm1107, %v1538, 0
        %v1679 = vsel %vm1107, %v1539, 0
        %v1682 = vsel %vm1107, %v1540, 0
        %v1685 = vsel %vm1107, %v1541, 0
        %v1688 = vsel %vm1107, %v1542, 0
        %v1691 = vsel %vm1107, %v1543, 0
        %v1694 = vsel %vm1107, %v1544, 0
        %v1697 = vsel %vm1107, %v1545, 0
        %v1700 = vsel %vm1107, %v1546, 0
        %v1703 = vsel %vm1107, %v1547, 0
        %v1706 = vsel %vm1107, %v1548, 0
        %v1709 = vsel %vm1107, %v1549, 0
        %v1712 = vsel %vm1107, %v1550, 0
        %v1715 = vsel %vm1107, %v1551, 0
        %v1718 = vsel %vm1107, %v1552, 0
        %v1721 = vsel %vm1107, %v1553, 0
        %v1724 = vsel %vm1107, %v1554, 0
        %v1727 = vsel %vm1107, %v1555, 0
        %v1730 = vsel %vm1107, %v1556, 0
        %v1733 = vsel %vm1107, %v1557, 0
        %v1736 = vsel %vm1107, %v1558, 0
        %v1739 = vsel %vm1107, %v1559, 0
        %v1742 = vsel %vm1107, %v1560, 0
        %v1745 = vsel %vm1107, %v1561, 0
        %v1748 = vsel %vm1107, %v1562, 0
        %v1751 = vsel %vm1107, %v1563, 0
        %v1754 = vsel %vm1107, %v1564, 0
        %v1757 = vsel %vm1107, %v1565, 0
        %1759 = vmatpush.msra.mxu0 0.0
        %1760 = vmatpush.msra.mxu0 0.0
        %1761 = vmatpush.msra.mxu0 0.0
        %1762 = vmatpush.msra.mxu0 0.0
        %1763 = vmatpush.msra.mxu0 0.0
        %1764 = vmatpush.msra.mxu0 0.0
        %1765 = vmatpush.msra.mxu0 0.0
        %1766 = vmatpush.msra.mxu0 0.0
        %1767 = vmatpush.msra.mxu0 0.0
        %1768 = vmatpush.msra.mxu0 0.0
        %1769 = vmatpush.msra.mxu0 0.0
        %1770 = vmatpush.msra.mxu0 0.0
        %1771 = vmatpush.msra.mxu0 %v1569
        %1772 = vmatpush.msra.mxu0 %v1568
        %1773 = vmatpush.msra.mxu0 %v1567
        %1774 = vmatpush.msra.mxu0 %v1566
        %1775 = vmatmul.f32.gmra.mxu0 %v1571
        %v1776 = vpop.f32.mrf.mxu0
        %v1777 = vadd.f32 0.0, %v1776
        %1778 = vmatmul.f32.gmra.mxu0 %v1574
        %v1779 = vpop.f32.mrf.mxu0
        %v1780 = vadd.f32 0.0, %v1779
        %1781 = vmatmul.f32.gmra.mxu0 %v1577
        %v1782 = vpop.f32.mrf.mxu0
        %v1783 = vadd.f32 0.0, %v1782
        %1784 = vmatmul.f32.gmra.mxu0 %v1580
        %v1785 = vpop.f32.mrf.mxu0
        %v1786 = vadd.f32 0.0, %v1785
        %1787 = vmatmul.f32.gmra.mxu0 %v1583
        %v1788 = vpop.f32.mrf.mxu0
        %v1789 = vadd.f32 0.0, %v1788
        %1790 = vmatmul.f32.gmra.mxu0 %v1586
        %v1791 = vpop.f32.mrf.mxu0
        %v1792 = vadd.f32 0.0, %v1791
        %1793 = vmatmul.f32.gmra.mxu0 %v1589
        %v1794 = vpop.f32.mrf.mxu0
        %v1795 = vadd.f32 0.0, %v1794
        %1796 = vmatmul.f32.gmra.mxu0 %v1592
        %v1797 = vpop.f32.mrf.mxu0
        %v1798 = vadd.f32 0.0, %v1797
        %1799 = vmatmul.f32.gmra.mxu0 %v1595
        %v1800 = vpop.f32.mrf.mxu0
        %v1801 = vadd.f32 0.0, %v1800
        %1802 = vmatmul.f32.gmra.mxu0 %v1598
        %v1803 = vpop.f32.mrf.mxu0
        %v1804 = vadd.f32 0.0, %v1803
        %1805 = vmatmul.f32.gmra.mxu0 %v1601
        %v1806 = vpop.f32.mrf.mxu0
        %v1807 = vadd.f32 0.0, %v1806
        %1808 = vmatmul.f32.gmra.mxu0 %v1604
        %v1809 = vpop.f32.mrf.mxu0
        %v1810 = vadd.f32 0.0, %v1809
        %1811 = vmatmul.f32.gmra.mxu0 %v1607
        %v1812 = vpop.f32.mrf.mxu0
        %v1813 = vadd.f32 0.0, %v1812
        %1814 = vmatmul.f32.gmra.mxu0 %v1610
        %v1815 = vpop.f32.mrf.mxu0
        %v1816 = vadd.f32 0.0, %v1815
        %1817 = vmatmul.f32.gmra.mxu0 %v1613
        %v1818 = vpop.f32.mrf.mxu0
        %v1819 = vadd.f32 0.0, %v1818
        %1820 = vmatmul.f32.gmra.mxu0 %v1616
        %v1821 = vpop.f32.mrf.mxu0
        %v1822 = vadd.f32 0.0, %v1821
        %1823 = vmatmul.f32.gmra.mxu0 %v1619
        %v1824 = vpop.f32.mrf.mxu0
        %v1825 = vadd.f32 0.0, %v1824
        %1826 = vmatmul.f32.gmra.mxu0 %v1622
        %v1827 = vpop.f32.mrf.mxu0
        %v1828 = vadd.f32 0.0, %v1827
        %1829 = vmatmul.f32.gmra.mxu0 %v1625
        %v1830 = vpop.f32.mrf.mxu0
        %v1831 = vadd.f32 0.0, %v1830
        %1832 = vmatmul.f32.gmra.mxu0 %v1628
        %v1833 = vpop.f32.mrf.mxu0
        %v1834 = vadd.f32 0.0, %v1833
        %1835 = vmatmul.f32.gmra.mxu0 %v1631
        %v1836 = vpop.f32.mrf.mxu0
        %v1837 = vadd.f32 0.0, %v1836
        %1838 = vmatmul.f32.gmra.mxu0 %v1634
        %v1839 = vpop.f32.mrf.mxu0
        %v1840 = vadd.f32 0.0, %v1839
        %1841 = vmatmul.f32.gmra.mxu0 %v1637
        %v1842 = vpop.f32.mrf.mxu0
        %v1843 = vadd.f32 0.0, %v1842
        %1844 = vmatmul.f32.gmra.mxu0 %v1640
        %v1845 = vpop.f32.mrf.mxu0
        %v1846 = vadd.f32 0.0, %v1845
        %1847 = vmatmul.f32.gmra.mxu0 %v1643
        %v1848 = vpop.f32.mrf.mxu0
        %v1849 = vadd.f32 0.0, %v1848
        %1850 = vmatmul.f32.gmra.mxu0 %v1646
        %v1851 = vpop.f32.mrf.mxu0
        %v1852 = vadd.f32 0.0, %v1851
        %1853 = vmatmul.f32.gmra.mxu0 %v1649
        %v1854 = vpop.f32.mrf.mxu0
        %v1855 = vadd.f32 0.0, %v1854
        %1856 = vmatmul.f32.gmra.mxu0 %v1652
        %v1857 = vpop.f32.mrf.mxu0
        %v1858 = vadd.f32 0.0, %v1857
        %1859 = vmatmul.f32.gmra.mxu0 %v1655
        %v1860 = vpop.f32.mrf.mxu0
        %v1861 = vadd.f32 0.0, %v1860
        %1862 = vmatmul.f32.gmra.mxu0 %v1658
        %v1863 = vpop.f32.mrf.mxu0
        %v1864 = vadd.f32 0.0, %v1863
        %1865 = vmatmul.f32.gmra.mxu0 %v1661
        %v1866 = vpop.f32.mrf.mxu0
        %v1867 = vadd.f32 0.0, %v1866
        %1868 = vmatmul.f32.gmra.mxu0 %v1664
        %v1869 = vpop.f32.mrf.mxu0
        %v1870 = vadd.f32 0.0, %v1869
        %1871 = vmatmul.f32.gmra.mxu0 %v1667
        %v1872 = vpop.f32.mrf.mxu0
        %v1873 = vadd.f32 0.0, %v1872
        %1874 = vmatmul.f32.gmra.mxu0 %v1670
        %v1875 = vpop.f32.mrf.mxu0
        %v1876 = vadd.f32 0.0, %v1875
        %1877 = vmatmul.f32.gmra.mxu0 %v1673
        %v1878 = vpop.f32.mrf.mxu0
        %v1879 = vadd.f32 0.0, %v1878
        %1880 = vmatmul.f32.gmra.mxu0 %v1676
        %v1881 = vpop.f32.mrf.mxu0
        %v1882 = vadd.f32 0.0, %v1881
        %1883 = vmatmul.f32.gmra.mxu0 %v1679
        %v1884 = vpop.f32.mrf.mxu0
        %v1885 = vadd.f32 0.0, %v1884
        %1886 = vmatmul.f32.gmra.mxu0 %v1682
        %v1887 = vpop.f32.mrf.mxu0
        %v1888 = vadd.f32 0.0, %v1887
        %1889 = vmatmul.f32.gmra.mxu0 %v1685
        %v1890 = vpop.f32.mrf.mxu0
        %v1891 = vadd.f32 0.0, %v1890
        %1892 = vmatmul.f32.gmra.mxu0 %v1688
        %v1893 = vpop.f32.mrf.mxu0
        %v1894 = vadd.f32 0.0, %v1893
        %1895 = vmatmul.f32.gmra.mxu0 %v1691
        %v1896 = vpop.f32.mrf.mxu0
        %v1897 = vadd.f32 0.0, %v1896
        %1898 = vmatmul.f32.gmra.mxu0 %v1694
        %v1899 = vpop.f32.mrf.mxu0
        %v1900 = vadd.f32 0.0, %v1899
        %1901 = vmatmul.f32.gmra.mxu0 %v1697
        %v1902 = vpop.f32.mrf.mxu0
        %v1903 = vadd.f32 0.0, %v1902
        %1904 = vmatmul.f32.gmra.mxu0 %v1700
        %v1905 = vpop.f32.mrf.mxu0
        %v1906 = vadd.f32 0.0, %v1905
        %1907 = vmatmul.f32.gmra.mxu0 %v1703
        %v1908 = vpop.f32.mrf.mxu0
        %v1909 = vadd.f32 0.0, %v1908
        %1910 = vmatmul.f32.gmra.mxu0 %v1706
        %v1911 = vpop.f32.mrf.mxu0
        %v1912 = vadd.f32 0.0, %v1911
        %1913 = vmatmul.f32.gmra.mxu0 %v1709
        %v1914 = vpop.f32.mrf.mxu0
        %v1915 = vadd.f32 0.0, %v1914
        %1916 = vmatmul.f32.gmra.mxu0 %v1712
        %v1917 = vpop.f32.mrf.mxu0
        %v1918 = vadd.f32 0.0, %v1917
        %1919 = vmatmul.f32.gmra.mxu0 %v1715
        %v1920 = vpop.f32.mrf.mxu0
        %v1921 = vadd.f32 0.0, %v1920
        %1922 = vmatmul.f32.gmra.mxu0 %v1718
        %v1923 = vpop.f32.mrf.mxu0
        %v1924 = vadd.f32 0.0, %v1923
        %1925 = vmatmul.f32.gmra.mxu0 %v1721
        %v1926 = vpop.f32.mrf.mxu0
        %v1927 = vadd.f32 0.0, %v1926
        %1928 = vmatmul.f32.gmra.mxu0 %v1724
        %v1929 = vpop.f32.mrf.mxu0
        %v1930 = vadd.f32 0.0, %v1929
        %1931 = vmatmul.f32.gmra.mxu0 %v1727
        %v1932 = vpop.f32.mrf.mxu0
        %v1933 = vadd.f32 0.0, %v1932
        %1934 = vmatmul.f32.gmra.mxu0 %v1730
        %v1935 = vpop.f32.mrf.mxu0
        %v1936 = vadd.f32 0.0, %v1935
        %1937 = vmatmul.f32.gmra.mxu0 %v1733
        %v1938 = vpop.f32.mrf.mxu0
        %v1939 = vadd.f32 0.0, %v1938
        %1940 = vmatmul.f32.gmra.mxu0 %v1736
        %v1941 = vpop.f32.mrf.mxu0
        %v1942 = vadd.f32 0.0, %v1941
        %1943 = vmatmul.f32.gmra.mxu0 %v1739
        %v1944 = vpop.f32.mrf.mxu0
        %v1945 = vadd.f32 0.0, %v1944
        %1946 = vmatmul.f32.gmra.mxu0 %v1742
        %v1947 = vpop.f32.mrf.mxu0
        %v1948 = vadd.f32 0.0, %v1947
        %1949 = vmatmul.f32.gmra.mxu0 %v1745
        %v1950 = vpop.f32.mrf.mxu0
        %v1951 = vadd.f32 0.0, %v1950
        %1952 = vmatmul.f32.gmra.mxu0 %v1748
        %v1953 = vpop.f32.mrf.mxu0
        %v1954 = vadd.f32 0.0, %v1953
        %1955 = vmatmul.f32.gmra.mxu0 %v1751
        %v1956 = vpop.f32.mrf.mxu0
        %v1957 = vadd.f32 0.0, %v1956
        %1958 = vmatmul.f32.gmra.mxu0 %v1754
        %v1959 = vpop.f32.mrf.mxu0
        %v1960 = vadd.f32 0.0, %v1959
        %1961 = vmatmul.f32.gmra.mxu0 %v1757
        %v1962 = vpop.f32.mrf.mxu0
        %v1963 = vadd.f32 0.0, %v1962
        %1964 = vdwg.mxu0
        %v1965 = vadd.f32 %v575, %v1777
        %v1966 = vadd.f32 %v578, %v1780
        %v1967 = vadd.f32 %v581, %v1783
        %v1968 = vadd.f32 %v584, %v1786
        %v1969 = vadd.f32 %v587, %v1789
        %v1970 = vadd.f32 %v590, %v1792
        %v1971 = vadd.f32 %v593, %v1795
        %v1972 = vadd.f32 %v596, %v1798
        %v1973 = vadd.f32 %v599, %v1801
        %v1974 = vadd.f32 %v602, %v1804
        %v1975 = vadd.f32 %v605, %v1807
        %v1976 = vadd.f32 %v608, %v1810
        %v1977 = vadd.f32 %v611, %v1813
        %v1978 = vadd.f32 %v614, %v1816
        %v1979 = vadd.f32 %v617, %v1819
        %v1980 = vadd.f32 %v620, %v1822
        %v1981 = vadd.f32 %v623, %v1825
        %v1982 = vadd.f32 %v626, %v1828
        %v1983 = vadd.f32 %v629, %v1831
        %v1984 = vadd.f32 %v632, %v1834
        %v1985 = vadd.f32 %v635, %v1837
        %v1986 = vadd.f32 %v638, %v1840
        %v1987 = vadd.f32 %v641, %v1843
        %v1988 = vadd.f32 %v644, %v1846
        %v1989 = vadd.f32 %v647, %v1849
        %v1990 = vadd.f32 %v650, %v1852
        %v1991 = vadd.f32 %v653, %v1855
        %v1992 = vadd.f32 %v656, %v1858
        %v1993 = vadd.f32 %v659, %v1861
        %v1994 = vadd.f32 %v662, %v1864
        %v1995 = vadd.f32 %v665, %v1867
        %v1996 = vadd.f32 %v668, %v1870
        %v1997 = vadd.f32 %v671, %v1873
        %v1998 = vadd.f32 %v674, %v1876
        %v1999 = vadd.f32 %v677, %v1879
        %v2000 = vadd.f32 %v680, %v1882
        %v2001 = vadd.f32 %v683, %v1885
        %v2002 = vadd.f32 %v686, %v1888
        %v2003 = vadd.f32 %v689, %v1891
        %v2004 = vadd.f32 %v692, %v1894
        %v2005 = vadd.f32 %v695, %v1897
        %v2006 = vadd.f32 %v698, %v1900
        %v2007 = vadd.f32 %v701, %v1903
        %v2008 = vadd.f32 %v704, %v1906
        %v2009 = vadd.f32 %v707, %v1909
        %v2010 = vadd.f32 %v710, %v1912
        %v2011 = vadd.f32 %v713, %v1915
        %v2012 = vadd.f32 %v716, %v1918
        %v2013 = vadd.f32 %v719, %v1921
        %v2014 = vadd.f32 %v722, %v1924
        %v2015 = vadd.f32 %v725, %v1927
        %v2016 = vadd.f32 %v728, %v1930
        %v2017 = vadd.f32 %v731, %v1933
        %v2018 = vadd.f32 %v734, %v1936
        %v2019 = vadd.f32 %v737, %v1939
        %v2020 = vadd.f32 %v740, %v1942
        %v2021 = vadd.f32 %v743, %v1945
        %v2022 = vadd.f32 %v746, %v1948
        %v2023 = vadd.f32 %v749, %v1951
        %v2024 = vadd.f32 %v752, %v1954
        %v2025 = vadd.f32 %v755, %v1957
        %v2026 = vadd.f32 %v758, %v1960
        %v2027 = vadd.f32 %v761, %v1963
        %v2028 = vtanh.pop %v1965
        %v2029 = vtanh.pop %v1966
        %v2030 = vtanh.pop %v1967
        %v2031 = vtanh.pop %v1968
        %v2032 = vtanh.pop %v1969
        %v2033 = vtanh.pop %v1970
        %v2034 = vtanh.pop %v1971
        %v2035 = vtanh.pop %v1972
        %v2036 = vtanh.pop %v1973
        %v2037 = vtanh.pop %v1974
        %v2038 = vtanh.pop %v1975
        %v2039 = vtanh.pop %v1976
        %v2040 = vtanh.pop %v1977
        %v2041 = vtanh.pop %v1978
        %v2042 = vtanh.pop %v1979
        %v2043 = vtanh.pop %v1980
        %v2044 = vtanh.pop %v1981
        %v2045 = vtanh.pop %v1982
        %v2046 = vtanh.pop %v1983
        %v2047 = vtanh.pop %v1984
        %v2048 = vtanh.pop %v1985
        %v2049 = vtanh.pop %v1986
        %v2050 = vtanh.pop %v1987
        %v2051 = vtanh.pop %v1988
        %v2052 = vtanh.pop %v1989
        %v2053 = vtanh.pop %v1990
        %v2054 = vtanh.pop %v1991
        %v2055 = vtanh.pop %v1992
        %v2056 = vtanh.pop %v1993
        %v2057 = vtanh.pop %v1994
        %v2058 = vtanh.pop %v1995
        %v2059 = vtanh.pop %v1996
        %v2060 = vtanh.pop %v1997
        %v2061 = vtanh.pop %v1998
        %v2062 = vtanh.pop %v1999
        %v2063 = vtanh.pop %v2000
        %v2064 = vtanh.pop %v2001
        %v2065 = vtanh.pop %v2002
        %v2066 = vtanh.pop %v2003
        %v2067 = vtanh.pop %v2004
        %v2068 = vtanh.pop %v2005
        %v2069 = vtanh.pop %v2006
        %v2070 = vtanh.pop %v2007
        %v2071 = vtanh.pop %v2008
        %v2072 = vtanh.pop %v2009
        %v2073 = vtanh.pop %v2010
        %v2074 = vtanh.pop %v2011
        %v2075 = vtanh.pop %v2012
        %v2076 = vtanh.pop %v2013
        %v2077 = vtanh.pop %v2014
        %v2078 = vtanh.pop %v2015
        %v2079 = vtanh.pop %v2016
        %v2080 = vtanh.pop %v2017
        %v2081 = vtanh.pop %v2018
        %v2082 = vtanh.pop %v2019
        %v2083 = vtanh.pop %v2020
        %v2084 = vtanh.pop %v2021
        %v2085 = vtanh.pop %v2022
        %v2086 = vtanh.pop %v2023
        %v2087 = vtanh.pop %v2024
        %v2088 = vtanh.pop %v2025
        %v2089 = vtanh.pop %v2026
        %v2090 = vtanh.pop %v2027
        %2091 = vrot.lane.b32.xlu0 %v2028, 64
        %v2092 = vpop.permute.xlu0 %2091
        %2093 = vrot.lane.b32.xlu0 %v2029, 64
        %v2094 = vpop.permute.xlu0 %2093
        %2095 = vrot.lane.b32.xlu0 %v2030, 64
        %v2096 = vpop.permute.xlu0 %2095
        %2097 = vrot.lane.b32.xlu0 %v2031, 64
        %v2098 = vpop.permute.xlu0 %2097
        %2099 = vrot.lane.b32.xlu0 %v2032, 64
        %v2100 = vpop.permute.xlu0 %2099
        %2101 = vrot.lane.b32.xlu0 %v2033, 64
        %v2102 = vpop.permute.xlu0 %2101
        %2103 = vrot.lane.b32.xlu0 %v2034, 64
        %v2104 = vpop.permute.xlu0 %2103
        %2105 = vrot.lane.b32.xlu0 %v2035, 64
        %v2106 = vpop.permute.xlu0 %2105
        %2107 = vrot.lane.b32.xlu0 %v2036, 64
        %v2108 = vpop.permute.xlu0 %2107
        %2109 = vrot.lane.b32.xlu0 %v2037, 64
        %v2110 = vpop.permute.xlu0 %2109
        %2111 = vrot.lane.b32.xlu0 %v2038, 64
        %v2112 = vpop.permute.xlu0 %2111
        %2113 = vrot.lane.b32.xlu0 %v2039, 64
        %v2114 = vpop.permute.xlu0 %2113
        %2115 = vrot.lane.b32.xlu0 %v2040, 64
        %v2116 = vpop.permute.xlu0 %2115
        %2117 = vrot.lane.b32.xlu0 %v2041, 64
        %v2118 = vpop.permute.xlu0 %2117
        %2119 = vrot.lane.b32.xlu0 %v2042, 64
        %v2120 = vpop.permute.xlu0 %2119
        %2121 = vrot.lane.b32.xlu0 %v2043, 64
        %v2122 = vpop.permute.xlu0 %2121
        %2123 = vrot.lane.b32.xlu0 %v2044, 64
        %v2124 = vpop.permute.xlu0 %2123
        %2125 = vrot.lane.b32.xlu0 %v2045, 64
        %v2126 = vpop.permute.xlu0 %2125
        %2127 = vrot.lane.b32.xlu0 %v2046, 64
        %v2128 = vpop.permute.xlu0 %2127
        %2129 = vrot.lane.b32.xlu0 %v2047, 64
        %v2130 = vpop.permute.xlu0 %2129
        %2131 = vrot.lane.b32.xlu0 %v2048, 64
        %v2132 = vpop.permute.xlu0 %2131
        %2133 = vrot.lane.b32.xlu0 %v2049, 64
        %v2134 = vpop.permute.xlu0 %2133
        %2135 = vrot.lane.b32.xlu0 %v2050, 64
        %v2136 = vpop.permute.xlu0 %2135
        %2137 = vrot.lane.b32.xlu0 %v2051, 64
        %v2138 = vpop.permute.xlu0 %2137
        %2139 = vrot.lane.b32.xlu0 %v2052, 64
        %v2140 = vpop.permute.xlu0 %2139
        %2141 = vrot.lane.b32.xlu0 %v2053, 64
        %v2142 = vpop.permute.xlu0 %2141
        %2143 = vrot.lane.b32.xlu0 %v2054, 64
        %v2144 = vpop.permute.xlu0 %2143
        %2145 = vrot.lane.b32.xlu0 %v2055, 64
        %v2146 = vpop.permute.xlu0 %2145
        %2147 = vrot.lane.b32.xlu0 %v2056, 64
        %v2148 = vpop.permute.xlu0 %2147
        %2149 = vrot.lane.b32.xlu0 %v2057, 64
        %v2150 = vpop.permute.xlu0 %2149
        %2151 = vrot.lane.b32.xlu0 %v2058, 64
        %v2152 = vpop.permute.xlu0 %2151
        %2153 = vrot.lane.b32.xlu0 %v2059, 64
        %v2154 = vpop.permute.xlu0 %2153
        %2155 = vrot.lane.b32.xlu0 %v2060, 64
        %v2156 = vpop.permute.xlu0 %2155
        %2157 = vrot.lane.b32.xlu0 %v2061, 64
        %v2158 = vpop.permute.xlu0 %2157
        %2159 = vrot.lane.b32.xlu0 %v2062, 64
        %v2160 = vpop.permute.xlu0 %2159
        %2161 = vrot.lane.b32.xlu0 %v2063, 64
        %v2162 = vpop.permute.xlu0 %2161
        %2163 = vrot.lane.b32.xlu0 %v2064, 64
        %v2164 = vpop.permute.xlu0 %2163
        %2165 = vrot.lane.b32.xlu0 %v2065, 64
        %v2166 = vpop.permute.xlu0 %2165
        %2167 = vrot.lane.b32.xlu0 %v2066, 64
        %v2168 = vpop.permute.xlu0 %2167
        %2169 = vrot.lane.b32.xlu0 %v2067, 64
        %v2170 = vpop.permute.xlu0 %2169
        %2171 = vrot.lane.b32.xlu0 %v2068, 64
        %v2172 = vpop.permute.xlu0 %2171
        %2173 = vrot.lane.b32.xlu0 %v2069, 64
        %v2174 = vpop.permute.xlu0 %2173
        %2175 = vrot.lane.b32.xlu0 %v2070, 64
        %v2176 = vpop.permute.xlu0 %2175
        %2177 = vrot.lane.b32.xlu0 %v2071, 64
        %v2178 = vpop.permute.xlu0 %2177
        %2179 = vrot.lane.b32.xlu0 %v2072, 64
        %v2180 = vpop.permute.xlu0 %2179
        %2181 = vrot.lane.b32.xlu0 %v2073, 64
        %v2182 = vpop.permute.xlu0 %2181
        %2183 = vrot.lane.b32.xlu0 %v2074, 64
        %v2184 = vpop.permute.xlu0 %2183
        %2185 = vrot.lane.b32.xlu0 %v2075, 64
        %v2186 = vpop.permute.xlu0 %2185
        %2187 = vrot.lane.b32.xlu0 %v2076, 64
        %v2188 = vpop.permute.xlu0 %2187
        %2189 = vrot.lane.b32.xlu0 %v2077, 64
        %v2190 = vpop.permute.xlu0 %2189
        %2191 = vrot.lane.b32.xlu0 %v2078, 64
        %v2192 = vpop.permute.xlu0 %2191
        %2193 = vrot.lane.b32.xlu0 %v2079, 64
        %v2194 = vpop.permute.xlu0 %2193
        %2195 = vrot.lane.b32.xlu0 %v2080, 64
        %v2196 = vpop.permute.xlu0 %2195
        %2197 = vrot.lane.b32.xlu0 %v2081, 64
        %v2198 = vpop.permute.xlu0 %2197
        %2199 = vrot.lane.b32.xlu0 %v2082, 64
        %v2200 = vpop.permute.xlu0 %2199
        %2201 = vrot.lane.b32.xlu0 %v2083, 64
        %v2202 = vpop.permute.xlu0 %2201
        %2203 = vrot.lane.b32.xlu0 %v2084, 64
        %v2204 = vpop.permute.xlu0 %2203
        %2205 = vrot.lane.b32.xlu0 %v2085, 64
        %v2206 = vpop.permute.xlu0 %2205
        %2207 = vrot.lane.b32.xlu0 %v2086, 64
        %v2208 = vpop.permute.xlu0 %2207
        %2209 = vrot.lane.b32.xlu0 %v2087, 64
        %v2210 = vpop.permute.xlu0 %2209
        %2211 = vrot.lane.b32.xlu0 %v2088, 64
        %v2212 = vpop.permute.xlu0 %2211
        %2213 = vrot.lane.b32.xlu0 %v2089, 64
        %v2214 = vpop.permute.xlu0 %2213
        %2215 = vrot.lane.b32.xlu0 %v2090, 64
        %v2216 = vpop.permute.xlu0 %2215
        %v2217 = vmul.f32 %v2092, 0.1
        %v2218 = vmul.f32 %v2094, 0.1
        %v2219 = vmul.f32 %v2096, 0.1
        %v2220 = vmul.f32 %v2098, 0.1
        %v2221 = vmul.f32 %v2100, 0.1
        %v2222 = vmul.f32 %v2102, 0.1
        %v2223 = vmul.f32 %v2104, 0.1
        %v2224 = vmul.f32 %v2106, 0.1
        %v2225 = vmul.f32 %v2108, 0.1
        %v2226 = vmul.f32 %v2110, 0.1
        %v2227 = vmul.f32 %v2112, 0.1
        %v2228 = vmul.f32 %v2114, 0.1
        %v2229 = vmul.f32 %v2116, 0.1
        %v2230 = vmul.f32 %v2118, 0.1
        %v2231 = vmul.f32 %v2120, 0.1
        %v2232 = vmul.f32 %v2122, 0.1
        %v2233 = vmul.f32 %v2124, 0.1
        %v2234 = vmul.f32 %v2126, 0.1
        %v2235 = vmul.f32 %v2128, 0.1
        %v2236 = vmul.f32 %v2130, 0.1
        %v2237 = vmul.f32 %v2132, 0.1
        %v2238 = vmul.f32 %v2134, 0.1
        %v2239 = vmul.f32 %v2136, 0.1
        %v2240 = vmul.f32 %v2138, 0.1
        %v2241 = vmul.f32 %v2140, 0.1
        %v2242 = vmul.f32 %v2142, 0.1
        %v2243 = vmul.f32 %v2144, 0.1
        %v2244 = vmul.f32 %v2146, 0.1
        %v2245 = vmul.f32 %v2148, 0.1
        %v2246 = vmul.f32 %v2150, 0.1
        %v2247 = vmul.f32 %v2152, 0.1
        %v2248 = vmul.f32 %v2154, 0.1
        %v2249 = vmul.f32 %v2156, 0.1
        %v2250 = vmul.f32 %v2158, 0.1
        %v2251 = vmul.f32 %v2160, 0.1
        %v2252 = vmul.f32 %v2162, 0.1
        %v2253 = vmul.f32 %v2164, 0.1
        %v2254 = vmul.f32 %v2166, 0.1
        %v2255 = vmul.f32 %v2168, 0.1
        %v2256 = vmul.f32 %v2170, 0.1
        %v2257 = vmul.f32 %v2172, 0.1
        %v2258 = vmul.f32 %v2174, 0.1
        %v2259 = vmul.f32 %v2176, 0.1
        %v2260 = vmul.f32 %v2178, 0.1
        %v2261 = vmul.f32 %v2180, 0.1
        %v2262 = vmul.f32 %v2182, 0.1
        %v2263 = vmul.f32 %v2184, 0.1
        %v2264 = vmul.f32 %v2186, 0.1
        %v2265 = vmul.f32 %v2188, 0.1
        %v2266 = vmul.f32 %v2190, 0.1
        %v2267 = vmul.f32 %v2192, 0.1
        %v2268 = vmul.f32 %v2194, 0.1
        %v2269 = vmul.f32 %v2196, 0.1
        %v2270 = vmul.f32 %v2198, 0.1
        %v2271 = vmul.f32 %v2200, 0.1
        %v2272 = vmul.f32 %v2202, 0.1
        %v2273 = vmul.f32 %v2204, 0.1
        %v2274 = vmul.f32 %v2206, 0.1
        %v2275 = vmul.f32 %v2208, 0.1
        %v2276 = vmul.f32 %v2210, 0.1
        %v2277 = vmul.f32 %v2212, 0.1
        %v2278 = vmul.f32 %v2214, 0.1
        %v2279 = vmul.f32 %v2216, 0.1
        %v2280 = vadd.f32 %v2028, %v2217
        %v2281 = vadd.f32 %v2029, %v2218
        %v2282 = vadd.f32 %v2030, %v2219
        %v2283 = vadd.f32 %v2031, %v2220
        %v2284 = vadd.f32 %v2032, %v2221
        %v2285 = vadd.f32 %v2033, %v2222
        %v2286 = vadd.f32 %v2034, %v2223
        %v2287 = vadd.f32 %v2035, %v2224
        %v2288 = vadd.f32 %v2036, %v2225
        %v2289 = vadd.f32 %v2037, %v2226
        %v2290 = vadd.f32 %v2038, %v2227
        %v2291 = vadd.f32 %v2039, %v2228
        %v2292 = vadd.f32 %v2040, %v2229
        %v2293 = vadd.f32 %v2041, %v2230
        %v2294 = vadd.f32 %v2042, %v2231
        %v2295 = vadd.f32 %v2043, %v2232
        %v2296 = vadd.f32 %v2044, %v2233
        %v2297 = vadd.f32 %v2045, %v2234
        %v2298 = vadd.f32 %v2046, %v2235
        %v2299 = vadd.f32 %v2047, %v2236
        %v2300 = vadd.f32 %v2048, %v2237
        %v2301 = vadd.f32 %v2049, %v2238
        %v2302 = vadd.f32 %v2050, %v2239
        %v2303 = vadd.f32 %v2051, %v2240
        %v2304 = vadd.f32 %v2052, %v2241
        %v2305 = vadd.f32 %v2053, %v2242
        %v2306 = vadd.f32 %v2054, %v2243
        %v2307 = vadd.f32 %v2055, %v2244
        %v2308 = vadd.f32 %v2056, %v2245
        %v2309 = vadd.f32 %v2057, %v2246
        %v2310 = vadd.f32 %v2058, %v2247
        %v2311 = vadd.f32 %v2059, %v2248
        %v2312 = vadd.f32 %v2060, %v2249
        %v2313 = vadd.f32 %v2061, %v2250
        %v2314 = vadd.f32 %v2062, %v2251
        %v2315 = vadd.f32 %v2063, %v2252
        %v2316 = vadd.f32 %v2064, %v2253
        %v2317 = vadd.f32 %v2065, %v2254
        %v2318 = vadd.f32 %v2066, %v2255
        %v2319 = vadd.f32 %v2067, %v2256
        %v2320 = vadd.f32 %v2068, %v2257
        %v2321 = vadd.f32 %v2069, %v2258
        %v2322 = vadd.f32 %v2070, %v2259
        %v2323 = vadd.f32 %v2071, %v2260
        %v2324 = vadd.f32 %v2072, %v2261
        %v2325 = vadd.f32 %v2073, %v2262
        %v2326 = vadd.f32 %v2074, %v2263
        %v2327 = vadd.f32 %v2075, %v2264
        %v2328 = vadd.f32 %v2076, %v2265
        %v2329 = vadd.f32 %v2077, %v2266
        %v2330 = vadd.f32 %v2078, %v2267
        %v2331 = vadd.f32 %v2079, %v2268
        %v2332 = vadd.f32 %v2080, %v2269
        %v2333 = vadd.f32 %v2081, %v2270
        %v2334 = vadd.f32 %v2082, %v2271
        %v2335 = vadd.f32 %v2083, %v2272
        %v2336 = vadd.f32 %v2084, %v2273
        %v2337 = vadd.f32 %v2085, %v2274
        %v2338 = vadd.f32 %v2086, %v2275
        %v2339 = vadd.f32 %v2087, %v2276
        %v2340 = vadd.f32 %v2088, %v2277
        %v2341 = vadd.f32 %v2089, %v2278
        %v2342 = vadd.f32 %v2090, %v2279
        %v2343 = vtanh.pop %v2280
        %v2344 = vtanh.pop %v2281
        %v2345 = vtanh.pop %v2282
        %v2346 = vtanh.pop %v2283
        %v2347 = vtanh.pop %v2284
        %v2348 = vtanh.pop %v2285
        %v2349 = vtanh.pop %v2286
        %v2350 = vtanh.pop %v2287
        %v2351 = vtanh.pop %v2288
        %v2352 = vtanh.pop %v2289
        %v2353 = vtanh.pop %v2290
        %v2354 = vtanh.pop %v2291
        %v2355 = vtanh.pop %v2292
        %v2356 = vtanh.pop %v2293
        %v2357 = vtanh.pop %v2294
        %v2358 = vtanh.pop %v2295
        %v2359 = vtanh.pop %v2296
        %v2360 = vtanh.pop %v2297
        %v2361 = vtanh.pop %v2298
        %v2362 = vtanh.pop %v2299
        %v2363 = vtanh.pop %v2300
        %v2364 = vtanh.pop %v2301
        %v2365 = vtanh.pop %v2302
        %v2366 = vtanh.pop %v2303
        %v2367 = vtanh.pop %v2304
        %v2368 = vtanh.pop %v2305
        %v2369 = vtanh.pop %v2306
        %v2370 = vtanh.pop %v2307
        %v2371 = vtanh.pop %v2308
        %v2372 = vtanh.pop %v2309
        %v2373 = vtanh.pop %v2310
        %v2374 = vtanh.pop %v2311
        %v2375 = vtanh.pop %v2312
        %v2376 = vtanh.pop %v2313
        %v2377 = vtanh.pop %v2314
        %v2378 = vtanh.pop %v2315
        %v2379 = vtanh.pop %v2316
        %v2380 = vtanh.pop %v2317
        %v2381 = vtanh.pop %v2318
        %v2382 = vtanh.pop %v2319
        %v2383 = vtanh.pop %v2320
        %v2384 = vtanh.pop %v2321
        %v2385 = vtanh.pop %v2322
        %v2386 = vtanh.pop %v2323
        %v2387 = vtanh.pop %v2324
        %v2388 = vtanh.pop %v2325
        %v2389 = vtanh.pop %v2326
        %v2390 = vtanh.pop %v2327
        %v2391 = vtanh.pop %v2328
        %v2392 = vtanh.pop %v2329
        %v2393 = vtanh.pop %v2330
        %v2394 = vtanh.pop %v2331
        %v2395 = vtanh.pop %v2332
        %v2396 = vtanh.pop %v2333
        %v2397 = vtanh.pop %v2334
        %v2398 = vtanh.pop %v2335
        %v2399 = vtanh.pop %v2336
        %v2400 = vtanh.pop %v2337
        %v2401 = vtanh.pop %v2338
        %v2402 = vtanh.pop %v2339
        %v2403 = vtanh.pop %v2340
        %v2404 = vtanh.pop %v2341
        %v2405 = vtanh.pop %v2342
        %v2406 = vld [vmem:[%s6] sm:$0x1]
        %v2408 = vperm.slane %v2406, 0
        %v2410 = vmul.f32 %v2343, %v2408
        %v2411 = vmul.f32 %v2344, %v2408
        %v2412 = vmul.f32 %v2345, %v2408
        %v2413 = vmul.f32 %v2346, %v2408
        %v2414 = vmul.f32 %v2347, %v2408
        %v2415 = vmul.f32 %v2348, %v2408
        %v2416 = vmul.f32 %v2349, %v2408
        %v2417 = vmul.f32 %v2350, %v2408
        %v2418 = vmul.f32 %v2351, %v2408
        %v2419 = vmul.f32 %v2352, %v2408
        %v2420 = vmul.f32 %v2353, %v2408
        %v2421 = vmul.f32 %v2354, %v2408
        %v2422 = vmul.f32 %v2355, %v2408
        %v2423 = vmul.f32 %v2356, %v2408
        %v2424 = vmul.f32 %v2357, %v2408
        %v2425 = vmul.f32 %v2358, %v2408
        %v2426 = vmul.f32 %v2359, %v2408
        %v2427 = vmul.f32 %v2360, %v2408
        %v2428 = vmul.f32 %v2361, %v2408
        %v2429 = vmul.f32 %v2362, %v2408
        %v2430 = vmul.f32 %v2363, %v2408
        %v2431 = vmul.f32 %v2364, %v2408
        %v2432 = vmul.f32 %v2365, %v2408
        %v2433 = vmul.f32 %v2366, %v2408
        %v2434 = vmul.f32 %v2367, %v2408
        %v2435 = vmul.f32 %v2368, %v2408
        %v2436 = vmul.f32 %v2369, %v2408
        %v2437 = vmul.f32 %v2370, %v2408
        %v2438 = vmul.f32 %v2371, %v2408
        %v2439 = vmul.f32 %v2372, %v2408
        %v2440 = vmul.f32 %v2373, %v2408
        %v2441 = vmul.f32 %v2374, %v2408
        %v2442 = vmul.f32 %v2375, %v2408
        %v2443 = vmul.f32 %v2376, %v2408
        %v2444 = vmul.f32 %v2377, %v2408
        %v2445 = vmul.f32 %v2378, %v2408
        %v2446 = vmul.f32 %v2379, %v2408
        %v2447 = vmul.f32 %v2380, %v2408
        %v2448 = vmul.f32 %v2381, %v2408
        %v2449 = vmul.f32 %v2382, %v2408
        %v2450 = vmul.f32 %v2383, %v2408
        %v2451 = vmul.f32 %v2384, %v2408
        %v2452 = vmul.f32 %v2385, %v2408
        %v2453 = vmul.f32 %v2386, %v2408
        %v2454 = vmul.f32 %v2387, %v2408
        %v2455 = vmul.f32 %v2388, %v2408
        %v2456 = vmul.f32 %v2389, %v2408
        %v2457 = vmul.f32 %v2390, %v2408
        %v2458 = vmul.f32 %v2391, %v2408
        %v2459 = vmul.f32 %v2392, %v2408
        %v2460 = vmul.f32 %v2393, %v2408
        %v2461 = vmul.f32 %v2394, %v2408
        %v2462 = vmul.f32 %v2395, %v2408
        %v2463 = vmul.f32 %v2396, %v2408
        %v2464 = vmul.f32 %v2397, %v2408
        %v2465 = vmul.f32 %v2398, %v2408
        %v2466 = vmul.f32 %v2399, %v2408
        %v2467 = vmul.f32 %v2400, %v2408
        %v2468 = vmul.f32 %v2401, %v2408
        %v2469 = vmul.f32 %v2402, %v2408
        %v2470 = vmul.f32 %v2403, %v2408
        %v2471 = vmul.f32 %v2404, %v2408
        %v2472 = vmul.f32 %v2405, %v2408
        %vm2473 = vcmask 31744
        %2474 = vst.msk [vmem:[%s280] sm:$0xff] %vm2473, %v2410
        %2475 = vst.msk [vmem:[%s280 + $0x8] sm:$0xff] %vm2473, %v2411
        %2476 = vst.msk [vmem:[%s280 + $0x10] sm:$0xff] %vm2473, %v2412
        %2477 = vst.msk [vmem:[%s280 + $0x18] sm:$0xff] %vm2473, %v2413
        %2478 = vst.msk [vmem:[%s280 + $0x20] sm:$0xff] %vm2473, %v2414
        %2479 = vst.msk [vmem:[%s280 + $0x28] sm:$0xff] %vm2473, %v2415
        %2480 = vst.msk [vmem:[%s280 + $0x30] sm:$0xff] %vm2473, %v2416
        %2481 = vst.msk [vmem:[%s280 + $0x38] sm:$0xff] %vm2473, %v2417
        %2482 = vst.msk [vmem:[%s280 + $0x40] sm:$0xff] %vm2473, %v2418
        %2483 = vst.msk [vmem:[%s280 + $0x48] sm:$0xff] %vm2473, %v2419
        %2484 = vst.msk [vmem:[%s280 + $0x50] sm:$0xff] %vm2473, %v2420
        %2485 = vst.msk [vmem:[%s280 + $0x58] sm:$0xff] %vm2473, %v2421
        %2486 = vst.msk [vmem:[%s280 + $0x60] sm:$0xff] %vm2473, %v2422
        %2487 = vst.msk [vmem:[%s280 + $0x68] sm:$0xff] %vm2473, %v2423
        %2488 = vst.msk [vmem:[%s280 + $0x70] sm:$0xff] %vm2473, %v2424
        %2489 = vst.msk [vmem:[%s280 + $0x78] sm:$0xff] %vm2473, %v2425
        %2490 = vst.msk [vmem:[%s280 + $0x80] sm:$0xff] %vm2473, %v2426
        %2491 = vst.msk [vmem:[%s280 + $0x88] sm:$0xff] %vm2473, %v2427
        %2492 = vst.msk [vmem:[%s280 + $0x90] sm:$0xff] %vm2473, %v2428
        %2493 = vst.msk [vmem:[%s280 + $0x98] sm:$0xff] %vm2473, %v2429
        %2494 = vst.msk [vmem:[%s280 + $0xa0] sm:$0xff] %vm2473, %v2430
        %2495 = vst.msk [vmem:[%s280 + $0xa8] sm:$0xff] %vm2473, %v2431
        %2496 = vst.msk [vmem:[%s280 + $0xb0] sm:$0xff] %vm2473, %v2432
        %2497 = vst.msk [vmem:[%s280 + $0xb8] sm:$0xff] %vm2473, %v2433
        %2498 = vst.msk [vmem:[%s280 + $0xc0] sm:$0xff] %vm2473, %v2434
        %2499 = vst.msk [vmem:[%s280 + $0xc8] sm:$0xff] %vm2473, %v2435
        %2500 = vst.msk [vmem:[%s280 + $0xd0] sm:$0xff] %vm2473, %v2436
        %2501 = vst.msk [vmem:[%s280 + $0xd8] sm:$0xff] %vm2473, %v2437
        %2502 = vst.msk [vmem:[%s280 + $0xe0] sm:$0xff] %vm2473, %v2438
        %2503 = vst.msk [vmem:[%s280 + $0xe8] sm:$0xff] %vm2473, %v2439
        %2504 = vst.msk [vmem:[%s280 + $0xf0] sm:$0xff] %vm2473, %v2440
        %2505 = vst.msk [vmem:[%s280 + $0xf8] sm:$0xff] %vm2473, %v2441
        %2506 = vst.msk [vmem:[%s280 + $0x100] sm:$0xff] %vm2473, %v2442
        %2507 = vst.msk [vmem:[%s280 + $0x108] sm:$0xff] %vm2473, %v2443
        %2508 = vst.msk [vmem:[%s280 + $0x110] sm:$0xff] %vm2473, %v2444
        %2509 = vst.msk [vmem:[%s280 + $0x118] sm:$0xff] %vm2473, %v2445
        %2510 = vst.msk [vmem:[%s280 + $0x120] sm:$0xff] %vm2473, %v2446
        %2511 = vst.msk [vmem:[%s280 + $0x128] sm:$0xff] %vm2473, %v2447
        %2512 = vst.msk [vmem:[%s280 + $0x130] sm:$0xff] %vm2473, %v2448
        %2513 = vst.msk [vmem:[%s280 + $0x138] sm:$0xff] %vm2473, %v2449
        %2514 = vst.msk [vmem:[%s280 + $0x140] sm:$0xff] %vm2473, %v2450
        %2515 = vst.msk [vmem:[%s280 + $0x148] sm:$0xff] %vm2473, %v2451
        %2516 = vst.msk [vmem:[%s280 + $0x150] sm:$0xff] %vm2473, %v2452
        %2517 = vst.msk [vmem:[%s280 + $0x158] sm:$0xff] %vm2473, %v2453
        %2518 = vst.msk [vmem:[%s280 + $0x160] sm:$0xff] %vm2473, %v2454
        %2519 = vst.msk [vmem:[%s280 + $0x168] sm:$0xff] %vm2473, %v2455
        %2520 = vst.msk [vmem:[%s280 + $0x170] sm:$0xff] %vm2473, %v2456
        %2521 = vst.msk [vmem:[%s280 + $0x178] sm:$0xff] %vm2473, %v2457
        %2522 = vst.msk [vmem:[%s280 + $0x180] sm:$0xff] %vm2473, %v2458
        %2523 = vst.msk [vmem:[%s280 + $0x188] sm:$0xff] %vm2473, %v2459
        %2524 = vst.msk [vmem:[%s280 + $0x190] sm:$0xff] %vm2473, %v2460
        %2525 = vst.msk [vmem:[%s280 + $0x198] sm:$0xff] %vm2473, %v2461
        %2526 = vst.msk [vmem:[%s280 + $0x1a0] sm:$0xff] %vm2473, %v2462
        %2527 = vst.msk [vmem:[%s280 + $0x1a8] sm:$0xff] %vm2473, %v2463
        %2528 = vst.msk [vmem:[%s280 + $0x1b0] sm:$0xff] %vm2473, %v2464
        %2529 = vst.msk [vmem:[%s280 + $0x1b8] sm:$0xff] %vm2473, %v2465
        %2530 = vst.msk [vmem:[%s280 + $0x1c0] sm:$0xff] %vm2473, %v2466
        %2531 = vst.msk [vmem:[%s280 + $0x1c8] sm:$0xff] %vm2473, %v2467
        %2532 = vst.msk [vmem:[%s280 + $0x1d0] sm:$0xff] %vm2473, %v2468
        %2533 = vst.msk [vmem:[%s280 + $0x1d8] sm:$0xff] %vm2473, %v2469
        %2534 = vst.msk [vmem:[%s280 + $0x1e0] sm:$0xff] %vm2473, %v2470
        %2535 = vst.msk [vmem:[%s280 + $0x1e8] sm:$0xff] %vm2473, %v2471
        %2536 = vst.msk [vmem:[%s280 + $0x1f0] sm:$0xff] %vm2473, %v2472
        %s2537 = sand.u32 %s178, 1
        %s2538 = sand.u32 %s178, 1
        %s2539 = smul.addr %s2538, 504
        %s2540 = scalar_lea.vmem [#allocation2], %s2539
        // Predicated region
        $region49: #{tpu_custom_call.1} parent=47 // pred_check
          %p2541 = pneg %p188
        $region50: #{tpu_custom_call.1} parent=47 // pred_check_branch
          %2543 = sbr.rel (%p2541) target = $region52
        $region51: #{tpu_custom_call.1} parent=47 // pred_region
          %s2544 = smul.u32 63, %s18
          %s2545 = ssub.s32 125, %s2544
          %p2546 = scmp.lt.s32.totalorder %s2545, 63
          %s2547 = scalar_select %p2546, %s2545, 63
          %s2548 = smul.u32 8, %s2547
          %p2549 = scmp.ne.s32.totalorder 0, %s2548
          %s2550 = smul.addr %s2544, 8
          %s2551 = scalar_lea.vmem %s7, %s2550
          // Predicated region
          $region53: #{tpu_custom_call.1} parent=51 // pred_check
            %p2552 = pneg %p2549
          $region54: #{tpu_custom_call.1} parent=51 // pred_check_branch
            %2554 = sbr.rel (%p2552) target = $region56
          $region55: #{tpu_custom_call.1} parent=51 // pred_region
            // Predicated region
            $region57: #{tpu_custom_call.1} parent=55 // pred_check
              _
            $region58: #{tpu_custom_call.1} parent=55 // pred_check_branch
              %2556 = sbr.rel (0) target = $region60
            $region59: #{tpu_custom_call.1} parent=55 // pred_region
              // Predicated region
              $region79: #{tpu_custom_call.1} parent=59 // pred_check
                _
              $region80: #{tpu_custom_call.1} parent=59 // pred_check_branch
                %2668 = sbr.rel (0) target = $region82
              $region81: #{tpu_custom_call.1} parent=59 // pred_region
                %s2669 = sshrl.u32 %s2547, 5
                // While loop
                $region83: #{tpu_custom_call.1} parent=81 // loop_pre_header
                  _
                $region84: #{tpu_custom_call.1} parent=81 // loop_header
                  %s2671 = sphi 0, %s2673
                  %p2672 = scmp.ge.s32.totalorder %s2671, %s2669
                  %s2676 = sphi 0, %s2745
                  %s2677 = sphi %s2540, %s2748
                  %s2678 = sphi %s2551, %s2749
                $region85: #{tpu_custom_call.1} parent=81 // loop_header_branch
                  %2675 = sbr.rel (%p2672) target = $region89
                $region86: #{tpu_custom_call.1} parent=81 // loop_body
                  %v2679 = vld [vmem:[%s2677] sm:$0xff]
                  %2680 = vst [vmem:[%s2678] sm:$0xff] %v2679
                  %v2681 = vld [vmem:[%s2677 + $0x8] sm:$0xff]
                  %2682 = vst [vmem:[%s2678 + $0x8] sm:$0xff] %v2681
                  %v2683 = vld [vmem:[%s2677 + $0x10] sm:$0xff]
                  %2684 = vst [vmem:[%s2678 + $0x10] sm:$0xff] %v2683
                  %v2685 = vld [vmem:[%s2677 + $0x18] sm:$0xff]
                  %2686 = vst [vmem:[%s2678 + $0x18] sm:$0xff] %v2685
                  %v2687 = vld [vmem:[%s2677 + $0x20] sm:$0xff]
                  %2688 = vst [vmem:[%s2678 + $0x20] sm:$0xff] %v2687
                  %v2689 = vld [vmem:[%s2677 + $0x28] sm:$0xff]
                  %2690 = vst [vmem:[%s2678 + $0x28] sm:$0xff] %v2689
                  %v2691 = vld [vmem:[%s2677 + $0x30] sm:$0xff]
                  %2692 = vst [vmem:[%s2678 + $0x30] sm:$0xff] %v2691
                  %v2693 = vld [vmem:[%s2677 + $0x38] sm:$0xff]
                  %2694 = vst [vmem:[%s2678 + $0x38] sm:$0xff] %v2693
                  %v2695 = vld [vmem:[%s2677 + $0x40] sm:$0xff]
                  %2696 = vst [vmem:[%s2678 + $0x40] sm:$0xff] %v2695
                  %v2697 = vld [vmem:[%s2677 + $0x48] sm:$0xff]
                  %2698 = vst [vmem:[%s2678 + $0x48] sm:$0xff] %v2697
                  %v2699 = vld [vmem:[%s2677 + $0x50] sm:$0xff]
                  %2700 = vst [vmem:[%s2678 + $0x50] sm:$0xff] %v2699
                  %v2701 = vld [vmem:[%s2677 + $0x58] sm:$0xff]
                  %2702 = vst [vmem:[%s2678 + $0x58] sm:$0xff] %v2701
                  %v2703 = vld [vmem:[%s2677 + $0x60] sm:$0xff]
                  %2704 = vst [vmem:[%s2678 + $0x60] sm:$0xff] %v2703
                  %v2705 = vld [vmem:[%s2677 + $0x68] sm:$0xff]
                  %2706 = vst [vmem:[%s2678 + $0x68] sm:$0xff] %v2705
                  %v2707 = vld [vmem:[%s2677 + $0x70] sm:$0xff]
                  %2708 = vst [vmem:[%s2678 + $0x70] sm:$0xff] %v2707
                  %v2709 = vld [vmem:[%s2677 + $0x78] sm:$0xff]
                  %2710 = vst [vmem:[%s2678 + $0x78] sm:$0xff] %v2709
                  %v2711 = vld [vmem:[%s2677 + $0x80] sm:$0xff]
                  %2712 = vst [vmem:[%s2678 + $0x80] sm:$0xff] %v2711
                  %v2713 = vld [vmem:[%s2677 + $0x88] sm:$0xff]
                  %2714 = vst [vmem:[%s2678 + $0x88] sm:$0xff] %v2713
                  %v2715 = vld [vmem:[%s2677 + $0x90] sm:$0xff]
                  %2716 = vst [vmem:[%s2678 + $0x90] sm:$0xff] %v2715
                  %v2717 = vld [vmem:[%s2677 + $0x98] sm:$0xff]
                  %2718 = vst [vmem:[%s2678 + $0x98] sm:$0xff] %v2717
                  %v2719 = vld [vmem:[%s2677 + $0xa0] sm:$0xff]
                  %2720 = vst [vmem:[%s2678 + $0xa0] sm:$0xff] %v2719
                  %v2721 = vld [vmem:[%s2677 + $0xa8] sm:$0xff]
                  %2722 = vst [vmem:[%s2678 + $0xa8] sm:$0xff] %v2721
                  %v2723 = vld [vmem:[%s2677 + $0xb0] sm:$0xff]
                  %2724 = vst [vmem:[%s2678 + $0xb0] sm:$0xff] %v2723
                  %v2725 = vld [vmem:[%s2677 + $0xb8] sm:$0xff]
                  %2726 = vst [vmem:[%s2678 + $0xb8] sm:$0xff] %v2725
                  %v2727 = vld [vmem:[%s2677 + $0xc0] sm:$0xff]
                  %2728 = vst [vmem:[%s2678 + $0xc0] sm:$0xff] %v2727
                  %v2729 = vld [vmem:[%s2677 + $0xc8] sm:$0xff]
                  %2730 = vst [vmem:[%s2678 + $0xc8] sm:$0xff] %v2729
                  %v2731 = vld [vmem:[%s2677 + $0xd0] sm:$0xff]
                  %2732 = vst [vmem:[%s2678 + $0xd0] sm:$0xff] %v2731
                  %v2733 = vld [vmem:[%s2677 + $0xd8] sm:$0xff]
                  %2734 = vst [vmem:[%s2678 + $0xd8] sm:$0xff] %v2733
                  %v2735 = vld [vmem:[%s2677 + $0xe0] sm:$0xff]
                  %2736 = vst [vmem:[%s2678 + $0xe0] sm:$0xff] %v2735
                  %v2737 = vld [vmem:[%s2677 + $0xe8] sm:$0xff]
                  %2738 = vst [vmem:[%s2678 + $0xe8] sm:$0xff] %v2737
                  %v2739 = vld [vmem:[%s2677 + $0xf0] sm:$0xff]
                  %2740 = vst [vmem:[%s2678 + $0xf0] sm:$0xff] %v2739
                  %v2741 = vld [vmem:[%s2677 + $0xf8] sm:$0xff]
                  %2742 = vst [vmem:[%s2678 + $0xf8] sm:$0xff] %v2741
                  %s2743 = sadd.s32 1, %s2676
                  %p2744 = scmp.ge.s32.totalorder %s2743, %s2669
                  %s2745 = scalar_select %p2744, 0, %s2743
                  %s2746 = smul.u32 %s2745, 256
                  %s2747 = smul.u32 %s2745, 256
                  %s2748 = scalar_lea.vmem %s2540, %s2746 [#allocation2]
                  %s2749 = scalar_lea.vmem %s2551, %s2747
                $region87: #{tpu_custom_call.1} parent=81 // loop_footer
                  %s2673 = sadd.s32 %s2671, 1
                $region88: #{tpu_custom_call.1} parent=81 // loop_footer_branch
                  %2670 = sbr.rel target = $region84
                $region89: #{tpu_custom_call.1} parent=81 // loop_exit
                  _
                %s2750 = sshrl.u32 %s2547, 5
                %s2751 = sand.u32 %s2547, 31
                %s2752 = smul.u32 %s2750, 32
                %s2753 = smul.u32 8, %s2752
                %s2754 = scalar_lea.vmem %s2540, %s2753 [#allocation2]
                %s2755 = smul.u32 8, %s2752
                %s2756 = scalar_lea.vmem %s2551, %s2755
                // While loop
                $region90: #{tpu_custom_call.1} parent=81 // loop_pre_header
                  _
                $region91: #{tpu_custom_call.1} parent=81 // loop_header
                  %s2758 = sphi 0, %s2760
                  %p2759 = scmp.ge.s32.totalorder %s2758, %s2751
                  %s2763 = sphi 0, %s2770
                  %s2764 = sphi %s2754, %s2773
                  %s2765 = sphi %s2756, %s2774
                $region92: #{tpu_custom_call.1} parent=81 // loop_header_branch
                  %2762 = sbr.rel (%p2759) target = $region96
                $region93: #{tpu_custom_call.1} parent=81 // loop_body
                  %v2766 = vld [vmem:[%s2764] sm:$0xff]
                  %2767 = vst [vmem:[%s2765] sm:$0xff] %v2766
                  %s2768 = sadd.s32 1, %s2763
                  %p2769 = scmp.ge.s32.totalorder %s2768, %s2751
                  %s2770 = scalar_select %p2769, 0, %s2768
                  %s2771 = smul.u32 %s2770, 8
                  %s2772 = smul.u32 %s2770, 8
                  %s2773 = scalar_lea.vmem %s2754, %s2771 [#allocation2]
                  %s2774 = scalar_lea.vmem %s2756, %s2772
                $region94: #{tpu_custom_call.1} parent=81 // loop_footer
                  %s2760 = sadd.s32 %s2758, 1
                $region95: #{tpu_custom_call.1} parent=81 // loop_footer_branch
                  %2757 = sbr.rel target = $region91
                $region96: #{tpu_custom_call.1} parent=81 // loop_exit
                  _
              $region82: #{tpu_custom_call.1} parent=59 // pred_fallthru
                _
              // Predicated region
              $region97: #{tpu_custom_call.1} parent=59 // pred_check
                _
              $region98: #{tpu_custom_call.1} parent=59 // pred_check_branch
                %2776 = sbr.rel target = $region100
              $region99: #{tpu_custom_call.1} parent=59 // pred_region
                _
              $region100: #{tpu_custom_call.1} parent=59 // pred_fallthru
                _
            $region60: #{tpu_custom_call.1} parent=55 // pred_fallthru
              _
            // Predicated region
            $region61: #{tpu_custom_call.1} parent=55 // pred_check
              _
            $region62: #{tpu_custom_call.1} parent=55 // pred_check_branch
              %2558 = sbr.rel target = $region64
            $region63: #{tpu_custom_call.1} parent=55 // pred_region
              %s2560 = ssub.s32 256, 1
              %s2561 = sshrl.u32 %s2547, 5
              // While loop
              $region65: #{tpu_custom_call.1} parent=63 // loop_pre_header
                _
              $region66: #{tpu_custom_call.1} parent=63 // loop_header
                %s2563 = sphi 0, %s2565
                %p2564 = scmp.ge.s32.totalorder %s2563, %s2561
                %s2568 = sphi 0, %s2637
                %s2569 = sphi %s2540, %s2640
                %s2570 = sphi %s2551, %s2641
              $region67: #{tpu_custom_call.1} parent=63 // loop_header_branch
                %2567 = sbr.rel (%p2564) target = $region71
              $region68: #{tpu_custom_call.1} parent=63 // loop_body
                %v2571 = vld [vmem:[%s2569] sm:%s2560]
                %2572 = vst [vmem:[%s2570] sm:%s2560] %v2571
                %v2573 = vld [vmem:[%s2569 + $0x8] sm:%s2560]
                %2574 = vst [vmem:[%s2570 + $0x8] sm:%s2560] %v2573
                %v2575 = vld [vmem:[%s2569 + $0x10] sm:%s2560]
                %2576 = vst [vmem:[%s2570 + $0x10] sm:%s2560] %v2575
                %v2577 = vld [vmem:[%s2569 + $0x18] sm:%s2560]
                %2578 = vst [vmem:[%s2570 + $0x18] sm:%s2560] %v2577
                %v2579 = vld [vmem:[%s2569 + $0x20] sm:%s2560]
                %2580 = vst [vmem:[%s2570 + $0x20] sm:%s2560] %v2579
                %v2581 = vld [vmem:[%s2569 + $0x28] sm:%s2560]
                %2582 = vst [vmem:[%s2570 + $0x28] sm:%s2560] %v2581
                %v2583 = vld [vmem:[%s2569 + $0x30] sm:%s2560]
                %2584 = vst [vmem:[%s2570 + $0x30] sm:%s2560] %v2583
                %v2585 = vld [vmem:[%s2569 + $0x38] sm:%s2560]
                %2586 = vst [vmem:[%s2570 + $0x38] sm:%s2560] %v2585
                %v2587 = vld [vmem:[%s2569 + $0x40] sm:%s2560]
                %2588 = vst [vmem:[%s2570 + $0x40] sm:%s2560] %v2587
                %v2589 = vld [vmem:[%s2569 + $0x48] sm:%s2560]
                %2590 = vst [vmem:[%s2570 + $0x48] sm:%s2560] %v2589
                %v2591 = vld [vmem:[%s2569 + $0x50] sm:%s2560]
                %2592 = vst [vmem:[%s2570 + $0x50] sm:%s2560] %v2591
                %v2593 = vld [vmem:[%s2569 + $0x58] sm:%s2560]
                %2594 = vst [vmem:[%s2570 + $0x58] sm:%s2560] %v2593
                %v2595 = vld [vmem:[%s2569 + $0x60] sm:%s2560]
                %2596 = vst [vmem:[%s2570 + $0x60] sm:%s2560] %v2595
                %v2597 = vld [vmem:[%s2569 + $0x68] sm:%s2560]
                %2598 = vst [vmem:[%s2570 + $0x68] sm:%s2560] %v2597
                %v2599 = vld [vmem:[%s2569 + $0x70] sm:%s2560]
                %2600 = vst [vmem:[%s2570 + $0x70] sm:%s2560] %v2599
                %v2601 = vld [vmem:[%s2569 + $0x78] sm:%s2560]
                %2602 = vst [vmem:[%s2570 + $0x78] sm:%s2560] %v2601
                %v2603 = vld [vmem:[%s2569 + $0x80] sm:%s2560]
                %2604 = vst [vmem:[%s2570 + $0x80] sm:%s2560] %v2603
                %v2605 = vld [vmem:[%s2569 + $0x88] sm:%s2560]
                %2606 = vst [vmem:[%s2570 + $0x88] sm:%s2560] %v2605
                %v2607 = vld [vmem:[%s2569 + $0x90] sm:%s2560]
                %2608 = vst [vmem:[%s2570 + $0x90] sm:%s2560] %v2607
                %v2609 = vld [vmem:[%s2569 + $0x98] sm:%s2560]
                %2610 = vst [vmem:[%s2570 + $0x98] sm:%s2560] %v2609
                %v2611 = vld [vmem:[%s2569 + $0xa0] sm:%s2560]
                %2612 = vst [vmem:[%s2570 + $0xa0] sm:%s2560] %v2611
                %v2613 = vld [vmem:[%s2569 + $0xa8] sm:%s2560]
                %2614 = vst [vmem:[%s2570 + $0xa8] sm:%s2560] %v2613
                %v2615 = vld [vmem:[%s2569 + $0xb0] sm:%s2560]
                %2616 = vst [vmem:[%s2570 + $0xb0] sm:%s2560] %v2615
                %v2617 = vld [vmem:[%s2569 + $0xb8] sm:%s2560]
                %2618 = vst [vmem:[%s2570 + $0xb8] sm:%s2560] %v2617
                %v2619 = vld [vmem:[%s2569 + $0xc0] sm:%s2560]
                %2620 = vst [vmem:[%s2570 + $0xc0] sm:%s2560] %v2619
                %v2621 = vld [vmem:[%s2569 + $0xc8] sm:%s2560]
                %2622 = vst [vmem:[%s2570 + $0xc8] sm:%s2560] %v2621
                %v2623 = vld [vmem:[%s2569 + $0xd0] sm:%s2560]
                %2624 = vst [vmem:[%s2570 + $0xd0] sm:%s2560] %v2623
                %v2625 = vld [vmem:[%s2569 + $0xd8] sm:%s2560]
                %2626 = vst [vmem:[%s2570 + $0xd8] sm:%s2560] %v2625
                %v2627 = vld [vmem:[%s2569 + $0xe0] sm:%s2560]
                %2628 = vst [vmem:[%s2570 + $0xe0] sm:%s2560] %v2627
                %v2629 = vld [vmem:[%s2569 + $0xe8] sm:%s2560]
                %2630 = vst [vmem:[%s2570 + $0xe8] sm:%s2560] %v2629
                %v2631 = vld [vmem:[%s2569 + $0xf0] sm:%s2560]
                %2632 = vst [vmem:[%s2570 + $0xf0] sm:%s2560] %v2631
                %v2633 = vld [vmem:[%s2569 + $0xf8] sm:%s2560]
                %2634 = vst [vmem:[%s2570 + $0xf8] sm:%s2560] %v2633
                %s2635 = sadd.s32 1, %s2568
                %p2636 = scmp.ge.s32.totalorder %s2635, %s2561
                %s2637 = scalar_select %p2636, 0, %s2635
                %s2638 = smul.u32 %s2637, 256
                %s2639 = smul.u32 %s2637, 256
                %s2640 = scalar_lea.vmem %s2540, %s2638 [#allocation2]
                %s2641 = scalar_lea.vmem %s2551, %s2639
              $region69: #{tpu_custom_call.1} parent=63 // loop_footer
                %s2565 = sadd.s32 %s2563, 1
              $region70: #{tpu_custom_call.1} parent=63 // loop_footer_branch
                %2562 = sbr.rel target = $region66
              $region71: #{tpu_custom_call.1} parent=63 // loop_exit
                _
              %s2642 = sshrl.u32 %s2547, 5
              %s2643 = sand.u32 %s2547, 31
              %s2644 = smul.u32 %s2642, 32
              %s2645 = smul.u32 8, %s2644
              %s2646 = scalar_lea.vmem %s2540, %s2645 [#allocation2]
              %s2647 = smul.u32 8, %s2644
              %s2648 = scalar_lea.vmem %s2551, %s2647
              // While loop
              $region72: #{tpu_custom_call.1} parent=63 // loop_pre_header
                _
              $region73: #{tpu_custom_call.1} parent=63 // loop_header
                %s2650 = sphi 0, %s2652
                %p2651 = scmp.ge.s32.totalorder %s2650, %s2643
                %s2655 = sphi 0, %s2662
                %s2656 = sphi %s2646, %s2665
                %s2657 = sphi %s2648, %s2666
              $region74: #{tpu_custom_call.1} parent=63 // loop_header_branch
                %2654 = sbr.rel (%p2651) target = $region78
              $region75: #{tpu_custom_call.1} parent=63 // loop_body
                %v2658 = vld [vmem:[%s2656] sm:%s2560]
                %2659 = vst [vmem:[%s2657] sm:%s2560] %v2658
                %s2660 = sadd.s32 1, %s2655
                %p2661 = scmp.ge.s32.totalorder %s2660, %s2643
                %s2662 = scalar_select %p2661, 0, %s2660
                %s2663 = smul.u32 %s2662, 8
                %s2664 = smul.u32 %s2662, 8
                %s2665 = scalar_lea.vmem %s2646, %s2663 [#allocation2]
                %s2666 = scalar_lea.vmem %s2648, %s2664
              $region76: #{tpu_custom_call.1} parent=63 // loop_footer
                %s2652 = sadd.s32 %s2650, 1
              $region77: #{tpu_custom_call.1} parent=63 // loop_footer_branch
                %2649 = sbr.rel target = $region73
              $region78: #{tpu_custom_call.1} parent=63 // loop_exit
                _
            $region64: #{tpu_custom_call.1} parent=55 // pred_fallthru
              _
          $region56: #{tpu_custom_call.1} parent=51 // pred_fallthru
            _
          %2777 = vnop
        $region52: #{tpu_custom_call.1} parent=47 // pred_fallthru
          _
      $region48: #{tpu_custom_call.1} parent=5 // pred_fallthru
        _
      %p2778 = scmp.le.s32.totalorder 2, %s13
      // Predicated region
      $region101: #{tpu_custom_call.1} parent=5 // pred_check
        %p2779 = pneg %p2778
      $region102: #{tpu_custom_call.1} parent=5 // pred_check_branch
        %2781 = sbr.rel (%p2779) target = $region104
      $region103: #{tpu_custom_call.1} parent=5 // pred_region
        %s2782 = ssub.s32 %s13, 2
        // Predicated region
        $region105: #{tpu_custom_call.1} parent=103 // pred_check
          %p2783 = pneg %p194
        $region106: #{tpu_custom_call.1} parent=103 // pred_check_branch
          %2785 = sbr.rel (%p2783) target = $region108
        $region107: #{tpu_custom_call.1} parent=103 // pred_region
          %s2786 = sand.u32 %s179, 1
          %s2787 = sand.u32 %s179, 1
          %s2788 = smul.addr %s2787, 504
          %s2789 = scalar_lea.vmem [#allocation2], %s2788
        $region108: #{tpu_custom_call.1} parent=103 // pred_fallthru
          _
      $region104: #{tpu_custom_call.1} parent=5 // pred_fallthru
        _
    $region6: #{tpu_custom_call.1} parent=1 // loop_footer
      %s17 = sadd.s32 1, %s13
    $region7: #{tpu_custom_call.1} parent=1 // loop_footer_branch
      %12 = sbr.rel target = $region3
    $region8: #{tpu_custom_call.1} parent=1 // loop_exit
      _

</llo_original>
